<compile_context>
chip_gen: v6e
topology: v6e:2x2x1
jax: 0.10.0
libtpu: 0.0.40
codegen_flags: <defaults>
</compile_context>

<pallas_src>
import functools

import jax
import jax.numpy as jnp
from jax import lax
from jax.experimental import pallas as pl
from jax.experimental.pallas import tpu as pltpu


def _lstm_kernel(num_layers, hidden_size, x_ref, *refs):
    """refs = [w_pack_0, bias_0, ..., w_pack_{L-1}, bias_{L-1},
               fc1_w, fc1_b, fc2_w, fc2_b, out_ref]

    w_pack_l : (in_dim_l + H, 4H) bf16 — [W_ih; W_hh] pre-transposed & packed,
               gate columns reordered to [i, f, o, g].
    bias_l   : (B_pad, 4H) f32 — (b_ih + b_hh), reordered, pre-broadcast.
    fc*_w    : pre-transposed to (in, out); fc*_b pre-broadcast to (B_pad, out).
    """
    out_ref = refs[-1]
    params = refs[:-1]
    layer_refs = [params[2 * l:2 * l + 2] for l in range(num_layers)]
    fc1_w_ref, fc1_b_ref, fc2_w_ref, fc2_b_ref = params[2 * num_layers:]

    T = x_ref.shape[0]
    Bp = x_ref.shape[1]
    H = hidden_size

    # Load weights once; everything is VMEM-resident (shapes are small).
    w_pack = [lr[0][...] for lr in layer_refs]   # (in_dim_l + H, 4H) bf16
    bias = [lr[1][...] for lr in layer_refs]     # (Bp, 4H) f32

    def step(t, carry):
        # carry = (h_0, c_0, h_1, c_1, ...), each (Bp, H) f32 — flat tuple.
        inp = x_ref[t]                           # (Bp, E)
        new_carry = []
        for l in range(num_layers):              # static unroll over layers
            h_prev = carry[2 * l]
            c_prev = carry[2 * l + 1]
            # Single fused gate matmul: [inp, h_prev] @ [W_ih; W_hh]
            # (bf16 inputs, f32 accumulate on the MXU).
            zin = jnp.concatenate([inp, h_prev], axis=-1).astype(jnp.bfloat16)
            gates = jnp.dot(zin, w_pack[l],
                            preferred_element_type=jnp.float32) + bias[l]
            # Gate order [i, f, o, g]: one sigmoid over 3H lanes, one tanh over H.
            sig = jax.nn.sigmoid(gates[:, :3 * H])
            g_g = jnp.tanh(gates[:, 3 * H:])
            i_g = sig[:, 0 * H:1 * H]
            f_g = sig[:, 1 * H:2 * H]
            o_g = sig[:, 2 * H:3 * H]
            c_new = f_g * c_prev + i_g * g_g
            h_new = o_g * jnp.tanh(c_new)
            new_carry += [h_new, c_new]
            inp = h_new                          # feed next layer
        return tuple(new_carry)

    carry = tuple(jnp.zeros((Bp, H), jnp.float32) for _ in range(2 * num_layers))
    if T <= 16:
        # Fully unroll the time loop: static time indices, lets the scheduler
        # overlap the next step's x_t load / W_ih half of the matmul with the
        # current step's gate math.
        for t in range(T):
            carry = step(t, carry)
    else:
        carry = lax.fori_loop(0, T, step, carry, unroll=4)

    # outputs[:, -1, :] of the top layer == top-layer h at t = T-1.
    last_h = carry[2 * (num_layers - 1)]          # (Bp, H)

    fc1 = jnp.maximum(
        jnp.dot(last_h, fc1_w_ref[...], preferred_element_type=jnp.float32)
        + fc1_b_ref[...], 0.0)                    # ReLU
    # TODO(synk): nn.Dropout is inference-mode identity here (training-only op).
    logits = (jnp.dot(fc1, fc2_w_ref[...], preferred_element_type=jnp.float32)
              + fc2_b_ref[...])
    out_ref[...] = logits.astype(out_ref.dtype)


def _reorder_ifgo_to_ifog(w, H):
    """PyTorch LSTM gate order [i, f, g, o] -> [i, f, o, g] along the 4H axis."""
    return jnp.concatenate(
        [w[0 * H:1 * H], w[1 * H:2 * H], w[3 * H:4 * H], w[2 * H:3 * H]], axis=0)


def init_params(key, embedding_dim, hidden_size, num_layers, vocab_size, num_classes):
    """Deterministic synthetic parameters with PyTorch-compatible shapes."""
    ks = jax.random.split(key, 4 * num_layers + 5)
    k_it = iter(ks)
    s = 0.1
    params = {
        "embedding": s * jax.random.normal(next(k_it), (vocab_size, embedding_dim),
                                           jnp.float32),
        "lstm": [],
    }
    for l in range(num_layers):
        in_dim = embedding_dim if l == 0 else hidden_size
        params["lstm"].append({
            "w_ih": s * jax.random.normal(next(k_it), (4 * hidden_size, in_dim), jnp.float32),
            "w_hh": s * jax.random.normal(next(k_it), (4 * hidden_size, hidden_size), jnp.float32),
            "b_ih": s * jax.random.normal(next(k_it), (4 * hidden_size,), jnp.float32),
            "b_hh": s * jax.random.normal(next(k_it), (4 * hidden_size,), jnp.float32),
        })
    params["fc1_w"] = s * jax.random.normal(next(k_it), (64, hidden_size), jnp.float32)
    params["fc1_b"] = s * jax.random.normal(next(k_it), (64,), jnp.float32)
    params["fc2_w"] = s * jax.random.normal(next(k_it), (num_classes, 64), jnp.float32)
    params["fc2_b"] = s * jax.random.normal(next(k_it), (num_classes,), jnp.float32)
    return params


def bilstm_forward(inputs, seq_lengths, params):
    """inputs: (B, T) int32 token ids; seq_lengths: (B,) ints (unused — the
    PyTorch forward takes outputs[:, -1, :] regardless of seq_lengths)."""
    del seq_lengths  # faithful to the reference forward: lengths are ignored
    emb = params["embedding"]                              # (V, E)
    x = jnp.take(emb, inputs, axis=0).astype(jnp.float32)  # (B, T, E) glue gather

    B, T = inputs.shape
    num_layers = len(params["lstm"])
    H = params["lstm"][0]["w_hh"].shape[1]
    F1 = params["fc1_w"].shape[0]
    C = params["fc2_w"].shape[0]

    # Pad batch to the f32 sublane granularity (8): full-sublane vregs / MXU
    # LHS rows, no masked partial ops; slice valid rows back out at the end.
    Bp = max(8, -(-B // 8) * 8)
    if Bp != B:
        x = jnp.pad(x, ((0, Bp - B), (0, 0), (0, 0)))
    x_tm = jnp.transpose(x, (1, 0, 2))                     # (T, Bp, E) time-major

    kernel_args = [x_tm]
    for lp in params["lstm"]:
        w_ih = _reorder_ifgo_to_ifog(lp["w_ih"], H)        # (4H, in_dim)
        w_hh = _reorder_ifgo_to_ifog(lp["w_hh"], H)        # (4H, H)
        # Packed, pre-transposed gate weight: (in_dim + H, 4H), bf16 for the MXU.
        w_pack = jnp.concatenate([w_ih, w_hh], axis=1).T.astype(jnp.bfloat16)
        b = _reorder_ifgo_to_ifog(lp["b_ih"] + lp["b_hh"], H)
        bias = jnp.broadcast_to(b.reshape(1, -1), (Bp, 4 * H)).astype(jnp.float32)
        kernel_args += [w_pack, bias]

    kernel_args += [
        params["fc1_w"].T.astype(jnp.float32),             # (H, 64)
        jnp.broadcast_to(params["fc1_b"].reshape(1, -1), (Bp, F1)).astype(jnp.float32),
        params["fc2_w"].T.astype(jnp.float32),             # (64, C)
        jnp.broadcast_to(params["fc2_b"].reshape(1, -1), (Bp, C)).astype(jnp.float32),
    ]

    kernel = functools.partial(_lstm_kernel, num_layers, H)
    vmem = pl.BlockSpec(memory_space=pltpu.MemorySpace.VMEM)
    out = pl.pallas_call(
        kernel,
        out_shape=jax.ShapeDtypeStruct((Bp, C), jnp.float32),
        in_specs=[vmem] * len(kernel_args),
        out_specs=vmem,
    )(*kernel_args)
    return out[:B]


if __name__ == "__main__":
    # Small shapes consistent with the module.
    embedding_dim = 32
    hidden_size = 32
    num_layers = 2
    vocab_size = 100
    num_classes = 4
    dropout = 0.5          # inference-mode identity
    batch = 2
    seq_len = 8

    key = jax.random.PRNGKey(0)
    k_param, k_tok = jax.random.split(key)
    params = init_params(k_param, embedding_dim, hidden_size, num_layers,
                         vocab_size, num_classes)

    inputs = jax.random.randint(k_tok, (batch, seq_len), 0, vocab_size, dtype=jnp.int32)
    seq_lengths = jnp.full((batch,), seq_len, dtype=jnp.int32)

    out = bilstm_forward(inputs, seq_lengths, params)
    out = jax.block_until_ready(out)
    assert out.shape == (batch, num_classes)
    print("KERNEL_OK")
</pallas_src>

<mosaic_0001>
module attributes {stable_mosaic.version = 11 : i64} {
  func.func @_lstm_kernel(%arg0: memref<8x8x32xf32, #tpu.memory_space<vmem>>, %arg1: memref<64x128xbf16, #tpu.memory_space<vmem>>, %arg2: memref<8x128xf32, #tpu.memory_space<vmem>>, %arg3: memref<64x128xbf16, #tpu.memory_space<vmem>>, %arg4: memref<8x128xf32, #tpu.memory_space<vmem>>, %arg5: memref<32x64xf32, #tpu.memory_space<vmem>>, %arg6: memref<8x64xf32, #tpu.memory_space<vmem>>, %arg7: memref<64x4xf32, #tpu.memory_space<vmem>>, %arg8: memref<8x4xf32, #tpu.memory_space<vmem>>, %arg9: memref<8x4xf32, #tpu.memory_space<vmem>>) attributes {dimension_semantics = [], scalar_prefetch = 0 : i64, scratch_operands = 0 : i64, tpu.core_type = #tpu.core_type<tc>} {
    %c0 = arith.constant 0 : index
    %c0_0 = arith.constant 0 : index
    %0 = vector.load %arg1[%c0, %c0_0] : memref<64x128xbf16, #tpu.memory_space<vmem>>, vector<64x128xbf16>
    %c0_1 = arith.constant 0 : index
    %c0_2 = arith.constant 0 : index
    %1 = vector.load %arg3[%c0_1, %c0_2] : memref<64x128xbf16, #tpu.memory_space<vmem>>, vector<64x128xbf16>
    %c0_3 = arith.constant 0 : index
    %c0_4 = arith.constant 0 : index
    %2 = vector.load %arg2[%c0_3, %c0_4] : memref<8x128xf32, #tpu.memory_space<vmem>>, vector<8x128xf32>
    %c0_5 = arith.constant 0 : index
    %c0_6 = arith.constant 0 : index
    %3 = vector.load %arg4[%c0_5, %c0_6] : memref<8x128xf32, #tpu.memory_space<vmem>>, vector<8x128xf32>
    %cst = arith.constant 0.000000e+00 : f32
    %4 = vector.broadcast %cst : f32 to vector<8x32xf32>
    %cst_7 = arith.constant 0.000000e+00 : f32
    %5 = vector.broadcast %cst_7 : f32 to vector<8x32xf32>
    %cst_8 = arith.constant 0.000000e+00 : f32
    %6 = vector.broadcast %cst_8 : f32 to vector<8x32xf32>
    %cst_9 = arith.constant 0.000000e+00 : f32
    %7 = vector.broadcast %cst_9 : f32 to vector<8x32xf32>
    %c0_10 = arith.constant 0 : index
    %c0_11 = arith.constant 0 : index
    %c0_12 = arith.constant 0 : index
    %8 = vector.load %arg0[%c0_10, %c0_11, %c0_12] : memref<8x8x32xf32, #tpu.memory_space<vmem>>, vector<1x8x32xf32>
    %9 = vector.shape_cast %8 : vector<1x8x32xf32> to vector<8x32xf32>
    %10 = tpu.concatenate %9, %4 in 1 : vector<8x32xf32>, vector<8x32xf32> -> vector<8x64xf32>
    %11 = arith.truncf %10 : vector<8x64xf32> to vector<8x64xbf16>
    %cst_13 = arith.constant dense<0.000000e+00> : vector<8x128xf32>
    %12 = tpu.matmul %11, %0, %cst_13 {dimension_numbers = #tpu.dot_dimension_numbers<[1], [0], [0], [1], [0, 0, 1, 1], [], []>} : vector<8x64xbf16>, vector<64x128xbf16>, vector<8x128xf32> -> vector<8x128xf32>
    %13 = arith.addf %12, %2 : vector<8x128xf32>
    %14 = vector.extract_strided_slice %13 {offsets = [0, 0], sizes = [8, 96], strides = [1, 1]} : vector<8x128xf32> to vector<8x96xf32>
    %15 = arith.negf %14 : vector<8x96xf32>
    %16 = math.exp %15 : vector<8x96xf32>
    %cst_14 = arith.constant 1.000000e+00 : f32
    %17 = vector.broadcast %cst_14 : f32 to vector<8x96xf32>
    %18 = arith.addf %17, %16 : vector<8x96xf32>
    %19 = arith.divf %17, %18 : vector<8x96xf32>
    %20 = vector.extract_strided_slice %13 {offsets = [0, 96], sizes = [8, 32], strides = [1, 1]} : vector<8x128xf32> to vector<8x32xf32>
    %21 = math.tanh %20 : vector<8x32xf32>
    %22 = vector.extract_strided_slice %19 {offsets = [0, 0], sizes = [8, 32], strides = [1, 1]} : vector<8x96xf32> to vector<8x32xf32>
    %23 = vector.extract_strided_slice %19 {offsets = [0, 32], sizes = [8, 32], strides = [1, 1]} : vector<8x96xf32> to vector<8x32xf32>
    %24 = vector.extract_strided_slice %19 {offsets = [0, 64], sizes = [8, 32], strides = [1, 1]} : vector<8x96xf32> to vector<8x32xf32>
    %25 = arith.mulf %23, %5 : vector<8x32xf32>
    %26 = arith.mulf %22, %21 : vector<8x32xf32>
    %27 = arith.addf %25, %26 : vector<8x32xf32>
    %28 = math.tanh %27 : vector<8x32xf32>
    %29 = arith.mulf %24, %28 : vector<8x32xf32>
    %30 = tpu.concatenate %29, %6 in 1 : vector<8x32xf32>, vector<8x32xf32> -> vector<8x64xf32>
    %31 = arith.truncf %30 : vector<8x64xf32> to vector<8x64xbf16>
    %cst_15 = arith.constant dense<0.000000e+00> : vector<8x128xf32>
    %32 = tpu.matmul %31, %1, %cst_15 {dimension_numbers = #tpu.dot_dimension_numbers<[1], [0], [0], [1], [0, 0, 1, 1], [], []>} : vector<8x64xbf16>, vector<64x128xbf16>, vector<8x128xf32> -> vector<8x128xf32>
    %33 = arith.addf %32, %3 : vector<8x128xf32>
    %34 = vector.extract_strided_slice %33 {offsets = [0, 0], sizes = [8, 96], strides = [1, 1]} : vector<8x128xf32> to vector<8x96xf32>
    %35 = arith.negf %34 : vector<8x96xf32>
    %36 = math.exp %35 : vector<8x96xf32>
    %cst_16 = arith.constant 1.000000e+00 : f32
    %37 = vector.broadcast %cst_16 : f32 to vector<8x96xf32>
    %38 = arith.addf %37, %36 : vector<8x96xf32>
    %39 = arith.divf %37, %38 : vector<8x96xf32>
    %40 = vector.extract_strided_slice %33 {offsets = [0, 96], sizes = [8, 32], strides = [1, 1]} : vector<8x128xf32> to vector<8x32xf32>
    %41 = math.tanh %40 : vector<8x32xf32>
    %42 = vector.extract_strided_slice %39 {offsets = [0, 0], sizes = [8, 32], strides = [1, 1]} : vector<8x96xf32> to vector<8x32xf32>
    %43 = vector.extract_strided_slice %39 {offsets = [0, 32], sizes = [8, 32], strides = [1, 1]} : vector<8x96xf32> to vector<8x32xf32>
    %44 = vector.extract_strided_slice %39 {offsets = [0, 64], sizes = [8, 32], strides = [1, 1]} : vector<8x96xf32> to vector<8x32xf32>
    %45 = arith.mulf %43, %7 : vector<8x32xf32>
    %46 = arith.mulf %42, %41 : vector<8x32xf32>
    %47 = arith.addf %45, %46 : vector<8x32xf32>
    %48 = math.tanh %47 : vector<8x32xf32>
    %49 = arith.mulf %44, %48 : vector<8x32xf32>
    %c1 = arith.constant 1 : index
    %c0_17 = arith.constant 0 : index
    %c0_18 = arith.constant 0 : index
    %50 = vector.load %arg0[%c1, %c0_17, %c0_18] : memref<8x8x32xf32, #tpu.memory_space<vmem>>, vector<1x8x32xf32>
    %51 = vector.shape_cast %50 : vector<1x8x32xf32> to vector<8x32xf32>
    %52 = tpu.concatenate %51, %29 in 1 : vector<8x32xf32>, vector<8x32xf32> -> vector<8x64xf32>
    %53 = arith.truncf %52 : vector<8x64xf32> to vector<8x64xbf16>
    %cst_19 = arith.constant dense<0.000000e+00> : vector<8x128xf32>
    %54 = tpu.matmul %53, %0, %cst_19 {dimension_numbers = #tpu.dot_dimension_numbers<[1], [0], [0], [1], [0, 0, 1, 1], [], []>} : vector<8x64xbf16>, vector<64x128xbf16>, vector<8x128xf32> -> vector<8x128xf32>
    %55 = arith.addf %54, %2 : vector<8x128xf32>
    %56 = vector.extract_strided_slice %55 {offsets = [0, 0], sizes = [8, 96], strides = [1, 1]} : vector<8x128xf32> to vector<8x96xf32>
    %57 = arith.negf %56 : vector<8x96xf32>
    %58 = math.exp %57 : vector<8x96xf32>
    %cst_20 = arith.constant 1.000000e+00 : f32
    %59 = vector.broadcast %cst_20 : f32 to vector<8x96xf32>
    %60 = arith.addf %59, %58 : vector<8x96xf32>
    %61 = arith.divf %59, %60 : vector<8x96xf32>
    %62 = vector.extract_strided_slice %55 {offsets = [0, 96], sizes = [8, 32], strides = [1, 1]} : vector<8x128xf32> to vector<8x32xf32>
    %63 = math.tanh %62 : vector<8x32xf32>
    %64 = vector.extract_strided_slice %61 {offsets = [0, 0], sizes = [8, 32], strides = [1, 1]} : vector<8x96xf32> to vector<8x32xf32>
    %65 = vector.extract_strided_slice %61 {offsets = [0, 32], sizes = [8, 32], strides = [1, 1]} : vector<8x96xf32> to vector<8x32xf32>
    %66 = vector.extract_strided_slice %61 {offsets = [0, 64], sizes = [8, 32], strides = [1, 1]} : vector<8x96xf32> to vector<8x32xf32>
    %67 = arith.mulf %65, %27 : vector<8x32xf32>
    %68 = arith.mulf %64, %63 : vector<8x32xf32>
    %69 = arith.addf %67, %68 : vector<8x32xf32>
    %70 = math.tanh %69 : vector<8x32xf32>
    %71 = arith.mulf %66, %70 : vector<8x32xf32>
    %72 = tpu.concatenate %71, %49 in 1 : vector<8x32xf32>, vector<8x32xf32> -> vector<8x64xf32>
    %73 = arith.truncf %72 : vector<8x64xf32> to vector<8x64xbf16>
    %cst_21 = arith.constant dense<0.000000e+00> : vector<8x128xf32>
    %74 = tpu.matmul %73, %1, %cst_21 {dimension_numbers = #tpu.dot_dimension_numbers<[1], [0], [0], [1], [0, 0, 1, 1], [], []>} : vector<8x64xbf16>, vector<64x128xbf16>, vector<8x128xf32> -> vector<8x128xf32>
    %75 = arith.addf %74, %3 : vector<8x128xf32>
    %76 = vector.extract_strided_slice %75 {offsets = [0, 0], sizes = [8, 96], strides = [1, 1]} : vector<8x128xf32> to vector<8x96xf32>
    %77 = arith.negf %76 : vector<8x96xf32>
    %78 = math.exp %77 : vector<8x96xf32>
    %cst_22 = arith.constant 1.000000e+00 : f32
    %79 = vector.broadcast %cst_22 : f32 to vector<8x96xf32>
    %80 = arith.addf %79, %78 : vector<8x96xf32>
    %81 = arith.divf %79, %80 : vector<8x96xf32>
    %82 = vector.extract_strided_slice %75 {offsets = [0, 96], sizes = [8, 32], strides = [1, 1]} : vector<8x128xf32> to vector<8x32xf32>
    %83 = math.tanh %82 : vector<8x32xf32>
    %84 = vector.extract_strided_slice %81 {offsets = [0, 0], sizes = [8, 32], strides = [1, 1]} : vector<8x96xf32> to vector<8x32xf32>
    %85 = vector.extract_strided_slice %81 {offsets = [0, 32], sizes = [8, 32], strides = [1, 1]} : vector<8x96xf32> to vector<8x32xf32>
    %86 = vector.extract_strided_slice %81 {offsets = [0, 64], sizes = [8, 32], strides = [1, 1]} : vector<8x96xf32> to vector<8x32xf32>
    %87 = arith.mulf %85, %47 : vector<8x32xf32>
    %88 = arith.mulf %84, %83 : vector<8x32xf32>
    %89 = arith.addf %87, %88 : vector<8x32xf32>
    %90 = math.tanh %89 : vector<8x32xf32>
    %91 = arith.mulf %86, %90 : vector<8x32xf32>
    %c2 = arith.constant 2 : index
    %c0_23 = arith.constant 0 : index
    %c0_24 = arith.constant 0 : index
    %92 = vector.load %arg0[%c2, %c0_23, %c0_24] : memref<8x8x32xf32, #tpu.memory_space<vmem>>, vector<1x8x32xf32>
    %93 = vector.shape_cast %92 : vector<1x8x32xf32> to vector<8x32xf32>
    %94 = tpu.concatenate %93, %71 in 1 : vector<8x32xf32>, vector<8x32xf32> -> vector<8x64xf32>
    %95 = arith.truncf %94 : vector<8x64xf32> to vector<8x64xbf16>
    %cst_25 = arith.constant dense<0.000000e+00> : vector<8x128xf32>
    %96 = tpu.matmul %95, %0, %cst_25 {dimension_numbers = #tpu.dot_dimension_numbers<[1], [0], [0], [1], [0, 0, 1, 1], [], []>} : vector<8x64xbf16>, vector<64x128xbf16>, vector<8x128xf32> -> vector<8x128xf32>
    %97 = arith.addf %96, %2 : vector<8x128xf32>
    %98 = vector.extract_strided_slice %97 {offsets = [0, 0], sizes = [8, 96], strides = [1, 1]} : vector<8x128xf32> to vector<8x96xf32>
    %99 = arith.negf %98 : vector<8x96xf32>
    %100 = math.exp %99 : vector<8x96xf32>
    %cst_26 = arith.constant 1.000000e+00 : f32
    %101 = vector.broadcast %cst_26 : f32 to vector<8x96xf32>
    %102 = arith.addf %101, %100 : vector<8x96xf32>
    %103 = arith.divf %101, %102 : vector<8x96xf32>
    %104 = vector.extract_strided_slice %97 {offsets = [0, 96], sizes = [8, 32], strides = [1, 1]} : vector<8x128xf32> to vector<8x32xf32>
    %105 = math.tanh %104 : vector<8x32xf32>
    %106 = vector.extract_strided_slice %103 {offsets = [0, 0], sizes = [8, 32], strides = [1, 1]} : vector<8x96xf32> to vector<8x32xf32>
    %107 = vector.extract_strided_slice %103 {offsets = [0, 32], sizes = [8, 32], strides = [1, 1]} : vector<8x96xf32> to vector<8x32xf32>
    %108 = vector.extract_strided_slice %103 {offsets = [0, 64], sizes = [8, 32], strides = [1, 1]} : vector<8x96xf32> to vector<8x32xf32>
    %109 = arith.mulf %107, %69 : vector<8x32xf32>
    %110 = arith.mulf %106, %105 : vector<8x32xf32>
    %111 = arith.addf %109, %110 : vector<8x32xf32>
    %112 = math.tanh %111 : vector<8x32xf32>
    %113 = arith.mulf %108, %112 : vector<8x32xf32>
    %114 = tpu.concatenate %113, %91 in 1 : vector<8x32xf32>, vector<8x32xf32> -> vector<8x64xf32>
    %115 = arith.truncf %114 : vector<8x64xf32> to vector<8x64xbf16>
    %cst_27 = arith.constant dense<0.000000e+00> : vector<8x128xf32>
    %116 = tpu.matmul %115, %1, %cst_27 {dimension_numbers = #tpu.dot_dimension_numbers<[1], [0], [0], [1], [0, 0, 1, 1], [], []>} : vector<8x64xbf16>, vector<64x128xbf16>, vector<8x128xf32> -> vector<8x128xf32>
    %117 = arith.addf %116, %3 : vector<8x128xf32>
    %118 = vector.extract_strided_slice %117 {offsets = [0, 0], sizes = [8, 96], strides = [1, 1]} : vector<8x128xf32> to vector<8x96xf32>
    %119 = arith.negf %118 : vector<8x96xf32>
    %120 = math.exp %119 : vector<8x96xf32>
    %cst_28 = arith.constant 1.000000e+00 : f32
    %121 = vector.broadcast %cst_28 : f32 to vector<8x96xf32>
    %122 = arith.addf %121, %120 : vector<8x96xf32>
    %123 = arith.divf %121, %122 : vector<8x96xf32>
    %124 = vector.extract_strided_slice %117 {offsets = [0, 96], sizes = [8, 32], strides = [1, 1]} : vector<8x128xf32> to vector<8x32xf32>
    %125 = math.tanh %124 : vector<8x32xf32>
    %126 = vector.extract_strided_slice %123 {offsets = [0, 0], sizes = [8, 32], strides = [1, 1]} : vector<8x96xf32> to vector<8x32xf32>
    %127 = vector.extract_strided_slice %123 {offsets = [0, 32], sizes = [8, 32], strides = [1, 1]} : vector<8x96xf32> to vector<8x32xf32>
    %128 = vector.extract_strided_slice %123 {offsets = [0, 64], sizes = [8, 32], strides = [1, 1]} : vector<8x96xf32> to vector<8x32xf32>
    %129 = arith.mulf %127, %89 : vector<8x32xf32>
    %130 = arith.mulf %126, %125 : vector<8x32xf32>
    %131 = arith.addf %129, %130 : vector<8x32xf32>
    %132 = math.tanh %131 : vector<8x32xf32>
    %133 = arith.mulf %128, %132 : vector<8x32xf32>
    %c3 = arith.constant 3 : index
    %c0_29 = arith.constant 0 : index
    %c0_30 = arith.constant 0 : index
    %134 = vector.load %arg0[%c3, %c0_29, %c0_30] : memref<8x8x32xf32, #tpu.memory_space<vmem>>, vector<1x8x32xf32>
    %135 = vector.shape_cast %134 : vector<1x8x32xf32> to vector<8x32xf32>
    %136 = tpu.concatenate %135, %113 in 1 : vector<8x32xf32>, vector<8x32xf32> -> vector<8x64xf32>
    %137 = arith.truncf %136 : vector<8x64xf32> to vector<8x64xbf16>
    %cst_31 = arith.constant dense<0.000000e+00> : vector<8x128xf32>
    %138 = tpu.matmul %137, %0, %cst_31 {dimension_numbers = #tpu.dot_dimension_numbers<[1], [0], [0], [1], [0, 0, 1, 1], [], []>} : vector<8x64xbf16>, vector<64x128xbf16>, vector<8x128xf32> -> vector<8x128xf32>
    %139 = arith.addf %138, %2 : vector<8x128xf32>
    %140 = vector.extract_strided_slice %139 {offsets = [0, 0], sizes = [8, 96], strides = [1, 1]} : vector<8x128xf32> to vector<8x96xf32>
    %141 = arith.negf %140 : vector<8x96xf32>
    %142 = math.exp %141 : vector<8x96xf32>
    %cst_32 = arith.constant 1.000000e+00 : f32
    %143 = vector.broadcast %cst_32 : f32 to vector<8x96xf32>
    %144 = arith.addf %143, %142 : vector<8x96xf32>
    %145 = arith.divf %143, %144 : vector<8x96xf32>
    %146 = vector.extract_strided_slice %139 {offsets = [0, 96], sizes = [8, 32], strides = [1, 1]} : vector<8x128xf32> to vector<8x32xf32>
    %147 = math.tanh %146 : vector<8x32xf32>
    %148 = vector.extract_strided_slice %145 {offsets = [0, 0], sizes = [8, 32], strides = [1, 1]} : vector<8x96xf32> to vector<8x32xf32>
    %149 = vector.extract_strided_slice %145 {offsets = [0, 32], sizes = [8, 32], strides = [1, 1]} : vector<8x96xf32> to vector<8x32xf32>
    %150 = vector.extract_strided_slice %145 {offsets = [0, 64], sizes = [8, 32], strides = [1, 1]} : vector<8x96xf32> to vector<8x32xf32>
    %151 = arith.mulf %149, %111 : vector<8x32xf32>
    %152 = arith.mulf %148, %147 : vector<8x32xf32>
    %153 = arith.addf %151, %152 : vector<8x32xf32>
    %154 = math.tanh %153 : vector<8x32xf32>
    %155 = arith.mulf %150, %154 : vector<8x32xf32>
    %156 = tpu.concatenate %155, %133 in 1 : vector<8x32xf32>, vector<8x32xf32> -> vector<8x64xf32>
    %157 = arith.truncf %156 : vector<8x64xf32> to vector<8x64xbf16>
    %cst_33 = arith.constant dense<0.000000e+00> : vector<8x128xf32>
    %158 = tpu.matmul %157, %1, %cst_33 {dimension_numbers = #tpu.dot_dimension_numbers<[1], [0], [0], [1], [0, 0, 1, 1], [], []>} : vector<8x64xbf16>, vector<64x128xbf16>, vector<8x128xf32> -> vector<8x128xf32>
    %159 = arith.addf %158, %3 : vector<8x128xf32>
    %160 = vector.extract_strided_slice %159 {offsets = [0, 0], sizes = [8, 96], strides = [1, 1]} : vector<8x128xf32> to vector<8x96xf32>
    %161 = arith.negf %160 : vector<8x96xf32>
    %162 = math.exp %161 : vector<8x96xf32>
    %cst_34 = arith.constant 1.000000e+00 : f32
    %163 = vector.broadcast %cst_34 : f32 to vector<8x96xf32>
    %164 = arith.addf %163, %162 : vector<8x96xf32>
    %165 = arith.divf %163, %164 : vector<8x96xf32>
    %166 = vector.extract_strided_slice %159 {offsets = [0, 96], sizes = [8, 32], strides = [1, 1]} : vector<8x128xf32> to vector<8x32xf32>
    %167 = math.tanh %166 : vector<8x32xf32>
    %168 = vector.extract_strided_slice %165 {offsets = [0, 0], sizes = [8, 32], strides = [1, 1]} : vector<8x96xf32> to vector<8x32xf32>
    %169 = vector.extract_strided_slice %165 {offsets = [0, 32], sizes = [8, 32], strides = [1, 1]} : vector<8x96xf32> to vector<8x32xf32>
    %170 = vector.extract_strided_slice %165 {offsets = [0, 64], sizes = [8, 32], strides = [1, 1]} : vector<8x96xf32> to vector<8x32xf32>
    %171 = arith.mulf %169, %131 : vector<8x32xf32>
    %172 = arith.mulf %168, %167 : vector<8x32xf32>
    %173 = arith.addf %171, %172 : vector<8x32xf32>
    %174 = math.tanh %173 : vector<8x32xf32>
    %175 = arith.mulf %170, %174 : vector<8x32xf32>
    %c4 = arith.constant 4 : index
    %c0_35 = arith.constant 0 : index
    %c0_36 = arith.constant 0 : index
    %176 = vector.load %arg0[%c4, %c0_35, %c0_36] : memref<8x8x32xf32, #tpu.memory_space<vmem>>, vector<1x8x32xf32>
    %177 = vector.shape_cast %176 : vector<1x8x32xf32> to vector<8x32xf32>
    %178 = tpu.concatenate %177, %155 in 1 : vector<8x32xf32>, vector<8x32xf32> -> vector<8x64xf32>
    %179 = arith.truncf %178 : vector<8x64xf32> to vector<8x64xbf16>
    %cst_37 = arith.constant dense<0.000000e+00> : vector<8x128xf32>
    %180 = tpu.matmul %179, %0, %cst_37 {dimension_numbers = #tpu.dot_dimension_numbers<[1], [0], [0], [1], [0, 0, 1, 1], [], []>} : vector<8x64xbf16>, vector<64x128xbf16>, vector<8x128xf32> -> vector<8x128xf32>
    %181 = arith.addf %180, %2 : vector<8x128xf32>
    %182 = vector.extract_strided_slice %181 {offsets = [0, 0], sizes = [8, 96], strides = [1, 1]} : vector<8x128xf32> to vector<8x96xf32>
    %183 = arith.negf %182 : vector<8x96xf32>
    %184 = math.exp %183 : vector<8x96xf32>
    %cst_38 = arith.constant 1.000000e+00 : f32
    %185 = vector.broadcast %cst_38 : f32 to vector<8x96xf32>
    %186 = arith.addf %185, %184 : vector<8x96xf32>
    %187 = arith.divf %185, %186 : vector<8x96xf32>
    %188 = vector.extract_strided_slice %181 {offsets = [0, 96], sizes = [8, 32], strides = [1, 1]} : vector<8x128xf32> to vector<8x32xf32>
    %189 = math.tanh %188 : vector<8x32xf32>
    %190 = vector.extract_strided_slice %187 {offsets = [0, 0], sizes = [8, 32], strides = [1, 1]} : vector<8x96xf32> to vector<8x32xf32>
    %191 = vector.extract_strided_slice %187 {offsets = [0, 32], sizes = [8, 32], strides = [1, 1]} : vector<8x96xf32> to vector<8x32xf32>
    %192 = vector.extract_strided_slice %187 {offsets = [0, 64], sizes = [8, 32], strides = [1, 1]} : vector<8x96xf32> to vector<8x32xf32>
    %193 = arith.mulf %191, %153 : vector<8x32xf32>
    %194 = arith.mulf %190, %189 : vector<8x32xf32>
    %195 = arith.addf %193, %194 : vector<8x32xf32>
    %196 = math.tanh %195 : vector<8x32xf32>
    %197 = arith.mulf %192, %196 : vector<8x32xf32>
    %198 = tpu.concatenate %197, %175 in 1 : vector<8x32xf32>, vector<8x32xf32> -> vector<8x64xf32>
    %199 = arith.truncf %198 : vector<8x64xf32> to vector<8x64xbf16>
    %cst_39 = arith.constant dense<0.000000e+00> : vector<8x128xf32>
    %200 = tpu.matmul %199, %1, %cst_39 {dimension_numbers = #tpu.dot_dimension_numbers<[1], [0], [0], [1], [0, 0, 1, 1], [], []>} : vector<8x64xbf16>, vector<64x128xbf16>, vector<8x128xf32> -> vector<8x128xf32>
    %201 = arith.addf %200, %3 : vector<8x128xf32>
    %202 = vector.extract_strided_slice %201 {offsets = [0, 0], sizes = [8, 96], strides = [1, 1]} : vector<8x128xf32> to vector<8x96xf32>
    %203 = arith.negf %202 : vector<8x96xf32>
    %204 = math.exp %203 : vector<8x96xf32>
    %cst_40 = arith.constant 1.000000e+00 : f32
    %205 = vector.broadcast %cst_40 : f32 to vector<8x96xf32>
    %206 = arith.addf %205, %204 : vector<8x96xf32>
    %207 = arith.divf %205, %206 : vector<8x96xf32>
    %208 = vector.extract_strided_slice %201 {offsets = [0, 96], sizes = [8, 32], strides = [1, 1]} : vector<8x128xf32> to vector<8x32xf32>
    %209 = math.tanh %208 : vector<8x32xf32>
    %210 = vector.extract_strided_slice %207 {offsets = [0, 0], sizes = [8, 32], strides = [1, 1]} : vector<8x96xf32> to vector<8x32xf32>
    %211 = vector.extract_strided_slice %207 {offsets = [0, 32], sizes = [8, 32], strides = [1, 1]} : vector<8x96xf32> to vector<8x32xf32>
    %212 = vector.extract_strided_slice %207 {offsets = [0, 64], sizes = [8, 32], strides = [1, 1]} : vector<8x96xf32> to vector<8x32xf32>
    %213 = arith.mulf %211, %173 : vector<8x32xf32>
    %214 = arith.mulf %210, %209 : vector<8x32xf32>
    %215 = arith.addf %213, %214 : vector<8x32xf32>
    %216 = math.tanh %215 : vector<8x32xf32>
    %217 = arith.mulf %212, %216 : vector<8x32xf32>
    %c5 = arith.constant 5 : index
    %c0_41 = arith.constant 0 : index
    %c0_42 = arith.constant 0 : index
    %218 = vector.load %arg0[%c5, %c0_41, %c0_42] : memref<8x8x32xf32, #tpu.memory_space<vmem>>, vector<1x8x32xf32>
    %219 = vector.shape_cast %218 : vector<1x8x32xf32> to vector<8x32xf32>
    %220 = tpu.concatenate %219, %197 in 1 : vector<8x32xf32>, vector<8x32xf32> -> vector<8x64xf32>
    %221 = arith.truncf %220 : vector<8x64xf32> to vector<8x64xbf16>
    %cst_43 = arith.constant dense<0.000000e+00> : vector<8x128xf32>
    %222 = tpu.matmul %221, %0, %cst_43 {dimension_numbers = #tpu.dot_dimension_numbers<[1], [0], [0], [1], [0, 0, 1, 1], [], []>} : vector<8x64xbf16>, vector<64x128xbf16>, vector<8x128xf32> -> vector<8x128xf32>
    %223 = arith.addf %222, %2 : vector<8x128xf32>
    %224 = vector.extract_strided_slice %223 {offsets = [0, 0], sizes = [8, 96], strides = [1, 1]} : vector<8x128xf32> to vector<8x96xf32>
    %225 = arith.negf %224 : vector<8x96xf32>
    %226 = math.exp %225 : vector<8x96xf32>
    %cst_44 = arith.constant 1.000000e+00 : f32
    %227 = vector.broadcast %cst_44 : f32 to vector<8x96xf32>
    %228 = arith.addf %227, %226 : vector<8x96xf32>
    %229 = arith.divf %227, %228 : vector<8x96xf32>
    %230 = vector.extract_strided_slice %223 {offsets = [0, 96], sizes = [8, 32], strides = [1, 1]} : vector<8x128xf32> to vector<8x32xf32>
    %231 = math.tanh %230 : vector<8x32xf32>
    %232 = vector.extract_strided_slice %229 {offsets = [0, 0], sizes = [8, 32], strides = [1, 1]} : vector<8x96xf32> to vector<8x32xf32>
    %233 = vector.extract_strided_slice %229 {offsets = [0, 32], sizes = [8, 32], strides = [1, 1]} : vector<8x96xf32> to vector<8x32xf32>
    %234 = vector.extract_strided_slice %229 {offsets = [0, 64], sizes = [8, 32], strides = [1, 1]} : vector<8x96xf32> to vector<8x32xf32>
    %235 = arith.mulf %233, %195 : vector<8x32xf32>
    %236 = arith.mulf %232, %231 : vector<8x32xf32>
    %237 = arith.addf %235, %236 : vector<8x32xf32>
    %238 = math.tanh %237 : vector<8x32xf32>
    %239 = arith.mulf %234, %238 : vector<8x32xf32>
    %240 = tpu.concatenate %239, %217 in 1 : vector<8x32xf32>, vector<8x32xf32> -> vector<8x64xf32>
    %241 = arith.truncf %240 : vector<8x64xf32> to vector<8x64xbf16>
    %cst_45 = arith.constant dense<0.000000e+00> : vector<8x128xf32>
    %242 = tpu.matmul %241, %1, %cst_45 {dimension_numbers = #tpu.dot_dimension_numbers<[1], [0], [0], [1], [0, 0, 1, 1], [], []>} : vector<8x64xbf16>, vector<64x128xbf16>, vector<8x128xf32> -> vector<8x128xf32>
    %243 = arith.addf %242, %3 : vector<8x128xf32>
    %244 = vector.extract_strided_slice %243 {offsets = [0, 0], sizes = [8, 96], strides = [1, 1]} : vector<8x128xf32> to vector<8x96xf32>
    %245 = arith.negf %244 : vector<8x96xf32>
    %246 = math.exp %245 : vector<8x96xf32>
    %cst_46 = arith.constant 1.000000e+00 : f32
    %247 = vector.broadcast %cst_46 : f32 to vector<8x96xf32>
    %248 = arith.addf %247, %246 : vector<8x96xf32>
    %249 = arith.divf %247, %248 : vector<8x96xf32>
    %250 = vector.extract_strided_slice %243 {offsets = [0, 96], sizes = [8, 32], strides = [1, 1]} : vector<8x128xf32> to vector<8x32xf32>
    %251 = math.tanh %250 : vector<8x32xf32>
    %252 = vector.extract_strided_slice %249 {offsets = [0, 0], sizes = [8, 32], strides = [1, 1]} : vector<8x96xf32> to vector<8x32xf32>
    %253 = vector.extract_strided_slice %249 {offsets = [0, 32], sizes = [8, 32], strides = [1, 1]} : vector<8x96xf32> to vector<8x32xf32>
    %254 = vector.extract_strided_slice %249 {offsets = [0, 64], sizes = [8, 32], strides = [1, 1]} : vector<8x96xf32> to vector<8x32xf32>
    %255 = arith.mulf %253, %215 : vector<8x32xf32>
    %256 = arith.mulf %252, %251 : vector<8x32xf32>
    %257 = arith.addf %255, %256 : vector<8x32xf32>
    %258 = math.tanh %257 : vector<8x32xf32>
    %259 = arith.mulf %254, %258 : vector<8x32xf32>
    %c6 = arith.constant 6 : index
    %c0_47 = arith.constant 0 : index
    %c0_48 = arith.constant 0 : index
    %260 = vector.load %arg0[%c6, %c0_47, %c0_48] : memref<8x8x32xf32, #tpu.memory_space<vmem>>, vector<1x8x32xf32>
    %261 = vector.shape_cast %260 : vector<1x8x32xf32> to vector<8x32xf32>
    %262 = tpu.concatenate %261, %239 in 1 : vector<8x32xf32>, vector<8x32xf32> -> vector<8x64xf32>
    %263 = arith.truncf %262 : vector<8x64xf32> to vector<8x64xbf16>
    %cst_49 = arith.constant dense<0.000000e+00> : vector<8x128xf32>
    %264 = tpu.matmul %263, %0, %cst_49 {dimension_numbers = #tpu.dot_dimension_numbers<[1], [0], [0], [1], [0, 0, 1, 1], [], []>} : vector<8x64xbf16>, vector<64x128xbf16>, vector<8x128xf32> -> vector<8x128xf32>
    %265 = arith.addf %264, %2 : vector<8x128xf32>
    %266 = vector.extract_strided_slice %265 {offsets = [0, 0], sizes = [8, 96], strides = [1, 1]} : vector<8x128xf32> to vector<8x96xf32>
    %267 = arith.negf %266 : vector<8x96xf32>
    %268 = math.exp %267 : vector<8x96xf32>
    %cst_50 = arith.constant 1.000000e+00 : f32
    %269 = vector.broadcast %cst_50 : f32 to vector<8x96xf32>
    %270 = arith.addf %269, %268 : vector<8x96xf32>
    %271 = arith.divf %269, %270 : vector<8x96xf32>
    %272 = vector.extract_strided_slice %265 {offsets = [0, 96], sizes = [8, 32], strides = [1, 1]} : vector<8x128xf32> to vector<8x32xf32>
    %273 = math.tanh %272 : vector<8x32xf32>
    %274 = vector.extract_strided_slice %271 {offsets = [0, 0], sizes = [8, 32], strides = [1, 1]} : vector<8x96xf32> to vector<8x32xf32>
    %275 = vector.extract_strided_slice %271 {offsets = [0, 32], sizes = [8, 32], strides = [1, 1]} : vector<8x96xf32> to vector<8x32xf32>
    %276 = vector.extract_strided_slice %271 {offsets = [0, 64], sizes = [8, 32], strides = [1, 1]} : vector<8x96xf32> to vector<8x32xf32>
    %277 = arith.mulf %275, %237 : vector<8x32xf32>
    %278 = arith.mulf %274, %273 : vector<8x32xf32>
    %279 = arith.addf %277, %278 : vector<8x32xf32>
    %280 = math.tanh %279 : vector<8x32xf32>
    %281 = arith.mulf %276, %280 : vector<8x32xf32>
    %282 = tpu.concatenate %281, %259 in 1 : vector<8x32xf32>, vector<8x32xf32> -> vector<8x64xf32>
    %283 = arith.truncf %282 : vector<8x64xf32> to vector<8x64xbf16>
    %cst_51 = arith.constant dense<0.000000e+00> : vector<8x128xf32>
    %284 = tpu.matmul %283, %1, %cst_51 {dimension_numbers = #tpu.dot_dimension_numbers<[1], [0], [0], [1], [0, 0, 1, 1], [], []>} : vector<8x64xbf16>, vector<64x128xbf16>, vector<8x128xf32> -> vector<8x128xf32>
    %285 = arith.addf %284, %3 : vector<8x128xf32>
    %286 = vector.extract_strided_slice %285 {offsets = [0, 0], sizes = [8, 96], strides = [1, 1]} : vector<8x128xf32> to vector<8x96xf32>
    %287 = arith.negf %286 : vector<8x96xf32>
    %288 = math.exp %287 : vector<8x96xf32>
    %cst_52 = arith.constant 1.000000e+00 : f32
    %289 = vector.broadcast %cst_52 : f32 to vector<8x96xf32>
    %290 = arith.addf %289, %288 : vector<8x96xf32>
    %291 = arith.divf %289, %290 : vector<8x96xf32>
    %292 = vector.extract_strided_slice %285 {offsets = [0, 96], sizes = [8, 32], strides = [1, 1]} : vector<8x128xf32> to vector<8x32xf32>
    %293 = math.tanh %292 : vector<8x32xf32>
    %294 = vector.extract_strided_slice %291 {offsets = [0, 0], sizes = [8, 32], strides = [1, 1]} : vector<8x96xf32> to vector<8x32xf32>
    %295 = vector.extract_strided_slice %291 {offsets = [0, 32], sizes = [8, 32], strides = [1, 1]} : vector<8x96xf32> to vector<8x32xf32>
    %296 = vector.extract_strided_slice %291 {offsets = [0, 64], sizes = [8, 32], strides = [1, 1]} : vector<8x96xf32> to vector<8x32xf32>
    %297 = arith.mulf %295, %257 : vector<8x32xf32>
    %298 = arith.mulf %294, %293 : vector<8x32xf32>
    %299 = arith.addf %297, %298 : vector<8x32xf32>
    %300 = math.tanh %299 : vector<8x32xf32>
    %301 = arith.mulf %296, %300 : vector<8x32xf32>
    %c7 = arith.constant 7 : index
    %c0_53 = arith.constant 0 : index
    %c0_54 = arith.constant 0 : index
    %302 = vector.load %arg0[%c7, %c0_53, %c0_54] : memref<8x8x32xf32, #tpu.memory_space<vmem>>, vector<1x8x32xf32>
    %303 = vector.shape_cast %302 : vector<1x8x32xf32> to vector<8x32xf32>
    %304 = tpu.concatenate %303, %281 in 1 : vector<8x32xf32>, vector<8x32xf32> -> vector<8x64xf32>
    %305 = arith.truncf %304 : vector<8x64xf32> to vector<8x64xbf16>
    %cst_55 = arith.constant dense<0.000000e+00> : vector<8x128xf32>
    %306 = tpu.matmul %305, %0, %cst_55 {dimension_numbers = #tpu.dot_dimension_numbers<[1], [0], [0], [1], [0, 0, 1, 1], [], []>} : vector<8x64xbf16>, vector<64x128xbf16>, vector<8x128xf32> -> vector<8x128xf32>
    %307 = arith.addf %306, %2 : vector<8x128xf32>
    %308 = vector.extract_strided_slice %307 {offsets = [0, 0], sizes = [8, 96], strides = [1, 1]} : vector<8x128xf32> to vector<8x96xf32>
    %309 = arith.negf %308 : vector<8x96xf32>
    %310 = math.exp %309 : vector<8x96xf32>
    %cst_56 = arith.constant 1.000000e+00 : f32
    %311 = vector.broadcast %cst_56 : f32 to vector<8x96xf32>
    %312 = arith.addf %311, %310 : vector<8x96xf32>
    %313 = arith.divf %311, %312 : vector<8x96xf32>
    %314 = vector.extract_strided_slice %307 {offsets = [0, 96], sizes = [8, 32], strides = [1, 1]} : vector<8x128xf32> to vector<8x32xf32>
    %315 = math.tanh %314 : vector<8x32xf32>
    %316 = vector.extract_strided_slice %313 {offsets = [0, 0], sizes = [8, 32], strides = [1, 1]} : vector<8x96xf32> to vector<8x32xf32>
    %317 = vector.extract_strided_slice %313 {offsets = [0, 32], sizes = [8, 32], strides = [1, 1]} : vector<8x96xf32> to vector<8x32xf32>
    %318 = vector.extract_strided_slice %313 {offsets = [0, 64], sizes = [8, 32], strides = [1, 1]} : vector<8x96xf32> to vector<8x32xf32>
    %319 = arith.mulf %317, %279 : vector<8x32xf32>
    %320 = arith.mulf %316, %315 : vector<8x32xf32>
    %321 = arith.addf %319, %320 : vector<8x32xf32>
    %322 = math.tanh %321 : vector<8x32xf32>
    %323 = arith.mulf %318, %322 : vector<8x32xf32>
    %324 = tpu.concatenate %323, %301 in 1 : vector<8x32xf32>, vector<8x32xf32> -> vector<8x64xf32>
    %325 = arith.truncf %324 : vector<8x64xf32> to vector<8x64xbf16>
    %cst_57 = arith.constant dense<0.000000e+00> : vector<8x128xf32>
    %326 = tpu.matmul %325, %1, %cst_57 {dimension_numbers = #tpu.dot_dimension_numbers<[1], [0], [0], [1], [0, 0, 1, 1], [], []>} : vector<8x64xbf16>, vector<64x128xbf16>, vector<8x128xf32> -> vector<8x128xf32>
    %327 = arith.addf %326, %3 : vector<8x128xf32>
    %328 = vector.extract_strided_slice %327 {offsets = [0, 0], sizes = [8, 96], strides = [1, 1]} : vector<8x128xf32> to vector<8x96xf32>
    %329 = arith.negf %328 : vector<8x96xf32>
    %330 = math.exp %329 : vector<8x96xf32>
    %cst_58 = arith.constant 1.000000e+00 : f32
    %331 = vector.broadcast %cst_58 : f32 to vector<8x96xf32>
    %332 = arith.addf %331, %330 : vector<8x96xf32>
    %333 = arith.divf %331, %332 : vector<8x96xf32>
    %334 = vector.extract_strided_slice %327 {offsets = [0, 96], sizes = [8, 32], strides = [1, 1]} : vector<8x128xf32> to vector<8x32xf32>
    %335 = math.tanh %334 : vector<8x32xf32>
    %336 = vector.extract_strided_slice %333 {offsets = [0, 0], sizes = [8, 32], strides = [1, 1]} : vector<8x96xf32> to vector<8x32xf32>
    %337 = vector.extract_strided_slice %333 {offsets = [0, 32], sizes = [8, 32], strides = [1, 1]} : vector<8x96xf32> to vector<8x32xf32>
    %338 = vector.extract_strided_slice %333 {offsets = [0, 64], sizes = [8, 32], strides = [1, 1]} : vector<8x96xf32> to vector<8x32xf32>
    %339 = arith.mulf %337, %299 : vector<8x32xf32>
    %340 = arith.mulf %336, %335 : vector<8x32xf32>
    %341 = arith.addf %339, %340 : vector<8x32xf32>
    %342 = math.tanh %341 : vector<8x32xf32>
    %343 = arith.mulf %338, %342 : vector<8x32xf32>
    %c0_59 = arith.constant 0 : index
    %c0_60 = arith.constant 0 : index
    %344 = vector.load %arg5[%c0_59, %c0_60] : memref<32x64xf32, #tpu.memory_space<vmem>>, vector<32x64xf32>
    %cst_61 = arith.constant dense<0.000000e+00> : vector<8x64xf32>
    %345 = tpu.matmul %343, %344, %cst_61 {dimension_numbers = #tpu.dot_dimension_numbers<[1], [0], [0], [1], [0, 0, 1, 1], [], []>} : vector<8x32xf32>, vector<32x64xf32>, vector<8x64xf32> -> vector<8x64xf32>
    %c0_62 = arith.constant 0 : index
    %c0_63 = arith.constant 0 : index
    %346 = vector.load %arg6[%c0_62, %c0_63] : memref<8x64xf32, #tpu.memory_space<vmem>>, vector<8x64xf32>
    %347 = arith.addf %345, %346 : vector<8x64xf32>
    %cst_64 = arith.constant 0.000000e+00 : f32
    %348 = vector.broadcast %cst_64 : f32 to vector<8x64xf32>
    %349 = arith.maximumf %347, %348 : vector<8x64xf32>
    %c0_65 = arith.constant 0 : index
    %c0_66 = arith.constant 0 : index
    %350 = vector.load %arg7[%c0_65, %c0_66] : memref<64x4xf32, #tpu.memory_space<vmem>>, vector<64x4xf32>
    %cst_67 = arith.constant dense<0.000000e+00> : vector<8x4xf32>
    %351 = tpu.matmul %349, %350, %cst_67 {dimension_numbers = #tpu.dot_dimension_numbers<[1], [0], [0], [1], [0, 0, 1, 1], [], []>} : vector<8x64xf32>, vector<64x4xf32>, vector<8x4xf32> -> vector<8x4xf32>
    %c0_68 = arith.constant 0 : index
    %c0_69 = arith.constant 0 : index
    %352 = vector.load %arg8[%c0_68, %c0_69] : memref<8x4xf32, #tpu.memory_space<vmem>>, vector<8x4xf32>
    %353 = arith.addf %351, %352 : vector<8x4xf32>
    %c0_70 = arith.constant 0 : index
    %c0_71 = arith.constant 0 : index
    %354 = vector.load %arg9[%c0_70, %c0_71] : memref<8x4xf32, #tpu.memory_space<vmem>>, vector<8x4xf32>
    tpu.vector_store %arg9[%c0_70, %c0_71], %353 {strides = array<i32>} : memref<8x4xf32, #tpu.memory_space<vmem>>, vector<8x4xf32>,
    return
  }
}

</mosaic_0001>

<llo_original>
// kernel: tpu_custom_call.1
$region0: #{tpu_custom_call.1}
  #allocation0 [shape = 'u32[]', space=smem, size = 0x4, offset = 0x4, fixed_abs, tag = 'smem constant byte address 0x4 - core index']
  #allocation1 [shape = 'u32[144,128]{1,0:T(1,128)}', space=vmem, size = 0x12000, scoped, tag = 'internal scratch']
  %s0 = inlined_call_operand.vmem [shape: f32[8,8,32], index: 0, kind: input, shape index: {}]
  %s1 = inlined_call_operand.hbm [shape: bf16[64,128], index: 1, kind: input, shape index: {}]
  %s2 = inlined_call_operand.vmem [shape: f32[8,128], index: 2, kind: input, shape index: {}]
  %s3 = inlined_call_operand.hbm [shape: bf16[64,128], index: 3, kind: input, shape index: {}]
  %s4 = inlined_call_operand.vmem [shape: f32[8,128], index: 4, kind: input, shape index: {}]
  %s5 = inlined_call_operand.hbm [shape: f32[32,64], index: 5, kind: input, shape index: {}]
  %s6 = inlined_call_operand.vmem [shape: f32[8,64], index: 6, kind: input, shape index: {}]
  %s7 = inlined_call_operand.vmem [shape: f32[64,4], index: 7, kind: input, shape index: {}]
  %s8 = inlined_call_operand.vmem [shape: f32[8,4], index: 8, kind: input, shape index: {}]
  %s9 = inlined_call_operand.vmem [shape: f32[8,4], index: 9, kind: output, shape index: {}]
  %s10 = sld [smem:[#allocation0]]
  $region58: #{tpu_custom_call.1} parent=0
    _
  %s12 = ssub.s32 1, %s10
  %s13 = scalar_select 0, %s12, %s10
  $region1: #{tpu_custom_call.1} parent=0
    #allocation2 [shape = 'u8[16384]{0}', space=vmem, size = 0x4000, scoped, tag = 'input window, operand 1, single buffered']
    #allocation3 [shape = 's32[1]{0}', space=sflag, size = 0x4, scoped, tag = 'scoped memory for tpu_custom_call.1']
    #allocation4 [shape = 'u8[16384]{0}', space=vmem, size = 0x4000, scoped, tag = 'input window, operand 3, single buffered']
    #allocation5 [shape = 's32[1]{0}', space=sflag, size = 0x4, scoped, tag = 'scoped memory for tpu_custom_call.1']
    #allocation6 [shape = 'u8[16384]{0}', space=vmem, size = 0x4000, scoped, tag = 'input window, operand 5, single buffered']
    %14 = vsyncpa [#allocation3], 0
    %15 = vsyncpa [#allocation5], 0
    // Predicated region
    $region2: #{tpu_custom_call.1} parent=1 // pred_check
      _
    $region3: #{tpu_custom_call.1} parent=1 // pred_check_branch
      %17 = sbr.rel (0) target = $region5
    $region4: #{tpu_custom_call.1} parent=1 // pred_region
      _
    $region5: #{tpu_custom_call.1} parent=1 // pred_fallthru
      _
    // Predicated region
    $region6: #{tpu_custom_call.1} parent=1 // pred_check
      _
    $region7: #{tpu_custom_call.1} parent=1 // pred_check_branch
      %19 = sbr.rel (0) target = $region9
    $region8: #{tpu_custom_call.1} parent=1 // pred_region
      %s21 = ssub.s32 512, 512
      %22 = vsyncadd [#allocation3], %s21
      %s23 = sshll.u32 [#allocation2], 4
      %s24 = int_to_ptr.vmem [resolvable:$true] %s23
      %29 = dma.hbm_to_vmem [thread:$0]  %s1, 512, %s24, [#allocation3], 64, 64, 4
    $region9: #{tpu_custom_call.1} parent=1 // pred_fallthru
      _
    // Predicated region
    $region10: #{tpu_custom_call.1} parent=1 // pred_check
      _
    $region11: #{tpu_custom_call.1} parent=1 // pred_check_branch
      %31 = sbr.rel (0) target = $region13
    $region12: #{tpu_custom_call.1} parent=1 // pred_region
      _
    $region13: #{tpu_custom_call.1} parent=1 // pred_fallthru
      _
    // Predicated region
    $region14: #{tpu_custom_call.1} parent=1 // pred_check
      _
    $region15: #{tpu_custom_call.1} parent=1 // pred_check_branch
      %33 = sbr.rel (0) target = $region17
    $region16: #{tpu_custom_call.1} parent=1 // pred_region
      %s35 = ssub.s32 512, 512
      %36 = vsyncadd [#allocation5], %s35
      %s37 = sshll.u32 [#allocation4], 4
      %s38 = int_to_ptr.vmem [resolvable:$true] %s37
      %43 = dma.hbm_to_vmem [thread:$0]  %s3, 512, %s38, [#allocation5], 64, 64, 4
    $region17: #{tpu_custom_call.1} parent=1 // pred_fallthru
      _
    // Predicated region
    $region18: #{tpu_custom_call.1} parent=1 // pred_check
      _
    $region19: #{tpu_custom_call.1} parent=1 // pred_check_branch
      %45 = sbr.rel (0) target = $region21
    $region20: #{tpu_custom_call.1} parent=1 // pred_region
      _
    $region21: #{tpu_custom_call.1} parent=1 // pred_fallthru
      _
    // Predicated region
    $region22: #{tpu_custom_call.1} parent=1 // pred_check
      _
    $region23: #{tpu_custom_call.1} parent=1 // pred_check_branch
      %47 = sbr.rel (0) target = $region25
    $region24: #{tpu_custom_call.1} parent=1 // pred_region
      %s49 = ssub.s32 512, 512
      %50 = vsyncadd [#allocation5], %s49
      %s51 = sshll.u32 [#allocation6], 4
      %s52 = int_to_ptr.vmem [resolvable:$true] %s51
      %57 = dma.hbm_to_vmem [thread:$0]  %s5, 512, %s52, [#allocation5], 128, 128, 8
    $region25: #{tpu_custom_call.1} parent=1 // pred_fallthru
      _
    // Predicated region
    $region26: #{tpu_custom_call.1} parent=1 // pred_check
      _
    $region27: #{tpu_custom_call.1} parent=1 // pred_check_branch
      %59 = sbr.rel (0) target = $region29
    $region28: #{tpu_custom_call.1} parent=1 // pred_region
      _
    $region29: #{tpu_custom_call.1} parent=1 // pred_fallthru
      _
    // Predicated region
    $region30: #{tpu_custom_call.1} parent=1 // pred_check
      _
    $region31: #{tpu_custom_call.1} parent=1 // pred_check_branch
      %61 = sbr.rel (0) target = $region33
    $region32: #{tpu_custom_call.1} parent=1 // pred_region
      _
    $region33: #{tpu_custom_call.1} parent=1 // pred_fallthru
      _
    // Predicated region
    $region34: #{tpu_custom_call.1} parent=1 // pred_check
      _
    $region35: #{tpu_custom_call.1} parent=1 // pred_check_branch
      %63 = sbr.rel (0) target = $region37
    $region36: #{tpu_custom_call.1} parent=1 // pred_region
      _
    $region37: #{tpu_custom_call.1} parent=1 // pred_fallthru
      _
    // Predicated region
    $region38: #{tpu_custom_call.1} parent=1 // pred_check
      _
    $region39: #{tpu_custom_call.1} parent=1 // pred_check_branch
      %65 = sbr.rel (0) target = $region41
    $region40: #{tpu_custom_call.1} parent=1 // pred_region
      %66 = dma.done [#allocation3], 512
    $region41: #{tpu_custom_call.1} parent=1 // pred_fallthru
      _
    // Predicated region
    $region42: #{tpu_custom_call.1} parent=1 // pred_check
      _
    $region43: #{tpu_custom_call.1} parent=1 // pred_check_branch
      %68 = sbr.rel (0) target = $region45
    $region44: #{tpu_custom_call.1} parent=1 // pred_region
      %69 = dma.done [#allocation5], 512
    $region45: #{tpu_custom_call.1} parent=1 // pred_fallthru
      _
    // Predicated region
    $region46: #{tpu_custom_call.1} parent=1 // pred_check
      _
    $region47: #{tpu_custom_call.1} parent=1 // pred_check_branch
      %71 = sbr.rel (0) target = $region49
    $region48: #{tpu_custom_call.1} parent=1 // pred_region
      %72 = dma.done [#allocation5], 512
    $region49: #{tpu_custom_call.1} parent=1 // pred_fallthru
      _
    %v74 = vld [vmem:[#allocation2] sm:$0xf]
    %v75 = vld [vmem:[#allocation2 + $0x4] sm:$0xf]
    %v76 = vld [vmem:[#allocation2 + $0x8] sm:$0xf]
    %v77 = vld [vmem:[#allocation2 + $0xc] sm:$0xf]
    %v78 = vld [vmem:[#allocation2 + $0x10] sm:$0xf]
    %v79 = vld [vmem:[#allocation2 + $0x14] sm:$0xf]
    %v80 = vld [vmem:[#allocation2 + $0x18] sm:$0xf]
    %v81 = vld [vmem:[#allocation2 + $0x1c] sm:$0xf]
    %v82 = vld [vmem:[#allocation4] sm:$0xf]
    %v83 = vld [vmem:[#allocation4 + $0x4] sm:$0xf]
    %v84 = vld [vmem:[#allocation4 + $0x8] sm:$0xf]
    %v85 = vld [vmem:[#allocation4 + $0xc] sm:$0xf]
    %v86 = vld [vmem:[#allocation4 + $0x10] sm:$0xf]
    %v87 = vld [vmem:[#allocation4 + $0x14] sm:$0xf]
    %v88 = vld [vmem:[#allocation4 + $0x18] sm:$0xf]
    %v89 = vld [vmem:[#allocation4 + $0x1c] sm:$0xf]
    %v90 = vld [vmem:[%s2] sm:$0xff]
    %v91 = vld [vmem:[%s4] sm:$0xff]
    %v92 = vld [vmem:[%s0] sm:$0xff]
    %vm93 = vcmask 261120
    %v94 = vsel %vm93, %v92, 0.0
    %v95 = vpack.c.bf16 %v94, %v94
    %v104 = vunpack.c.l.b16 %v74
    %v105 = vunpack.c.l.b16 %v75
    %v106 = vunpack.c.l.b16 %v76
    %v107 = vunpack.c.l.b16 %v77
    %v108 = vunpack.c.l.b16 %v78
    %v109 = vunpack.c.l.b16 %v79
    %v110 = vunpack.c.l.b16 %v80
    %v111 = vunpack.c.l.b16 %v81
    %v112 = vpack.c.b16 %v105, %v104
    %v113 = vpack.c.b16 %v107, %v106
    %v114 = vpack.c.b16 %v109, %v108
    %v115 = vpack.c.b16 %v111, %v110
    %vm120 = vcmask 523264
    %v122 = vsel %vm120, %v95, 0
    %124 = vmatprep.subr.bf16.mxu0 0
    %125 = vmatpush1.bf16.msra.mxu0 0
    %126 = vmatprep.subr.bf16.mxu0 0
    %127 = vmatpush1.bf16.msra.mxu0 0
    %128 = vmatprep.subr.bf16.mxu0 0
    %129 = vmatpush1.bf16.msra.mxu0 0
    %130 = vmatprep.subr.bf16.mxu0 0
    %131 = vmatpush1.bf16.msra.mxu0 0
    %132 = vmatprep.subr.bf16.mxu0 0
    %133 = vmatpush1.bf16.msra.mxu0 %v115
    %134 = vmatprep.subr.bf16.mxu0 0
    %135 = vmatpush1.bf16.msra.mxu0 %v114
    %136 = vmatprep.subr.bf16.mxu0 0
    %137 = vmatpush1.bf16.msra.mxu0 %v113
    %138 = vmatprep.subr.bf16.mxu0 0
    %139 = vmatpush1.bf16.msra.mxu0 %v112
    %140 = vmatprep.subr.bf16.mxu0 0
    %141 = vmatpush2.bf16.msra.mxu0 0
    %142 = vmatprep.subr.bf16.mxu0 0
    %143 = vmatpush2.bf16.msra.mxu0 0
    %144 = vmatprep.subr.bf16.mxu0 0
    %145 = vmatpush2.bf16.msra.mxu0 0
    %146 = vmatprep.subr.bf16.mxu0 0
    %147 = vmatpush2.bf16.msra.mxu0 0
    %148 = vmatprep.subr.bf16.mxu0 0
    %149 = vmatpush2.bf16.msra.mxu0 0
    %150 = vmatprep.subr.bf16.mxu0 0
    %151 = vmatpush2.bf16.msra.mxu0 0
    %152 = vmatprep.subr.bf16.mxu0 0
    %153 = vmatpush2.bf16.msra.mxu0 0
    %154 = vmatprep.subr.bf16.mxu0 0
    %155 = vmatpush2.bf16.msra.mxu0 0
    %156 = vmatprep.mubr.bf16.mxu0 0
    %157 = vmatmul.mubr.bf16.gmra.mxu0 %v122
    %v158 = vpop.f32.mrf.mxu0
    %v159 = vadd.f32 %v90, %v158
    %v160 = vpop.f32.mrf.mxu0
    %v161 = vpop.f32.mrf.mxu0
    %v162 = vpop.f32.mrf.mxu0
    %163 = vdwg.mxu0
    %v164 = vxor.u32 %v159, 2147483648
    %v165 = vmul.f32 %v164, 1.442695
    %v166 = vpow.pop %v165
    %v167 = vadd.f32 %v166, 1.0
    %v168 = vrcp.pop %v167
    %v169 = vmul.f32 1.0, %v168
    %v170 = vtanh.pop %v159
    %v171 = vmul.f32 %v169, 0.0
    %173 = vrot.lane.b32.xlu0 %v170, 32
    %v174 = vpop.permute.xlu0 %173
    %v176 = vmul.f32 %v169, %v174
    %178 = vrot.lane.b32.xlu0 %v176, 32
    %v179 = vpop.permute.xlu0 %178
    %v181 = vadd.f32 %v171, %v179
    %v182 = vtanh.pop %v181
    %184 = vrot.lane.b32.xlu0 %v182, 32
    %v185 = vpop.permute.xlu0 %184
    %v187 = vmul.f32 %v169, %v185
    %189 = vrot.lane.b32.xlu0 %v187, 64
    %v190 = vpop.permute.xlu0 %189
    %v192 = vsel %vm93, %v190, 0.0
    %v193 = vpack.c.bf16 %v192, %v192
    %v202 = vunpack.c.l.b16 %v82
    %v203 = vunpack.c.l.b16 %v83
    %v204 = vunpack.c.l.b16 %v84
    %v205 = vunpack.c.l.b16 %v85
    %v206 = vunpack.c.l.b16 %v86
    %v207 = vunpack.c.l.b16 %v87
    %v208 = vunpack.c.l.b16 %v88
    %v209 = vunpack.c.l.b16 %v89
    %v210 = vpack.c.b16 %v203, %v202
    %v211 = vpack.c.b16 %v205, %v204
    %v212 = vpack.c.b16 %v207, %v206
    %v213 = vpack.c.b16 %v209, %v208
    %v219 = vsel %vm120, %v193, 0
    %221 = vmatprep.subr.bf16.mxu0 0
    %222 = vmatpush1.bf16.msra.mxu0 0
    %223 = vmatprep.subr.bf16.mxu0 0
    %224 = vmatpush1.bf16.msra.mxu0 0
    %225 = vmatprep.subr.bf16.mxu0 0
    %226 = vmatpush1.bf16.msra.mxu0 0
    %227 = vmatprep.subr.bf16.mxu0 0
    %228 = vmatpush1.bf16.msra.mxu0 0
    %229 = vmatprep.subr.bf16.mxu0 0
    %230 = vmatpush1.bf16.msra.mxu0 %v213
    %231 = vmatprep.subr.bf16.mxu0 0
    %232 = vmatpush1.bf16.msra.mxu0 %v212
    %233 = vmatprep.subr.bf16.mxu0 0
    %234 = vmatpush1.bf16.msra.mxu0 %v211
    %235 = vmatprep.subr.bf16.mxu0 0
    %236 = vmatpush1.bf16.msra.mxu0 %v210
    %237 = vmatprep.subr.bf16.mxu0 0
    %238 = vmatpush2.bf16.msra.mxu0 0
    %239 = vmatprep.subr.bf16.mxu0 0
    %240 = vmatpush2.bf16.msra.mxu0 0
    %241 = vmatprep.subr.bf16.mxu0 0
    %242 = vmatpush2.bf16.msra.mxu0 0
    %243 = vmatprep.subr.bf16.mxu0 0
    %244 = vmatpush2.bf16.msra.mxu0 0
    %245 = vmatprep.subr.bf16.mxu0 0
    %246 = vmatpush2.bf16.msra.mxu0 0
    %247 = vmatprep.subr.bf16.mxu0 0
    %248 = vmatpush2.bf16.msra.mxu0 0
    %249 = vmatprep.subr.bf16.mxu0 0
    %250 = vmatpush2.bf16.msra.mxu0 0
    %251 = vmatprep.subr.bf16.mxu0 0
    %252 = vmatpush2.bf16.msra.mxu0 0
    %253 = vmatprep.mubr.bf16.mxu0 0
    %254 = vmatmul.mubr.bf16.gmra.mxu0 %v219
    %v255 = vpop.f32.mrf.mxu0
    %v256 = vadd.f32 %v91, %v255
    %v257 = vpop.f32.mrf.mxu0
    %v258 = vpop.f32.mrf.mxu0
    %v259 = vpop.f32.mrf.mxu0
    %260 = vdwg.mxu0
    %v261 = vxor.u32 %v256, 2147483648
    %v262 = vmul.f32 %v261, 1.442695
    %v263 = vpow.pop %v262
    %v264 = vadd.f32 %v263, 1.0
    %v265 = vrcp.pop %v264
    %v266 = vmul.f32 1.0, %v265
    %v267 = vtanh.pop %v256
    %v268 = vmul.f32 %v266, 0.0
    %270 = vrot.lane.b32.xlu0 %v267, 32
    %v271 = vpop.permute.xlu0 %270
    %v273 = vmul.f32 %v266, %v271
    %275 = vrot.lane.b32.xlu0 %v273, 32
    %v276 = vpop.permute.xlu0 %275
    %v278 = vadd.f32 %v268, %v276
    %v279 = vtanh.pop %v278
    %281 = vrot.lane.b32.xlu0 %v279, 32
    %v282 = vpop.permute.xlu0 %281
    %v284 = vmul.f32 %v266, %v282
    %s285 = scalar_lea.vmem %s0, 8
    %v286 = vld [vmem:[%s285] sm:$0xff]
    %287 = vrot.lane.b32.xlu0 %v187, 96
    %v288 = vpop.permute.xlu0 %287
    %v290 = vsel %vm93, %v286, %v288
    %v291 = vpack.c.bf16 %v290, %v290
    %v293 = vsel %vm120, %v291, 0
    %295 = vmatprep.subr.bf16.mxu0 0
    %296 = vmatpush1.bf16.msra.mxu0 0
    %297 = vmatprep.subr.bf16.mxu0 0
    %298 = vmatpush1.bf16.msra.mxu0 0
    %299 = vmatprep.subr.bf16.mxu0 0
    %300 = vmatpush1.bf16.msra.mxu0 0
    %301 = vmatprep.subr.bf16.mxu0 0
    %302 = vmatpush1.bf16.msra.mxu0 0
    %303 = vmatprep.subr.bf16.mxu0 0
    %304 = vmatpush1.bf16.msra.mxu0 %v115
    %305 = vmatprep.subr.bf16.mxu0 0
    %306 = vmatpush1.bf16.msra.mxu0 %v114
    %307 = vmatprep.subr.bf16.mxu0 0
    %308 = vmatpush1.bf16.msra.mxu0 %v113
    %309 = vmatprep.subr.bf16.mxu0 0
    %310 = vmatpush1.bf16.msra.mxu0 %v112
    %311 = vmatprep.subr.bf16.mxu0 0
    %312 = vmatpush2.bf16.msra.mxu0 0
    %313 = vmatprep.subr.bf16.mxu0 0
    %314 = vmatpush2.bf16.msra.mxu0 0
    %315 = vmatprep.subr.bf16.mxu0 0
    %316 = vmatpush2.bf16.msra.mxu0 0
    %317 = vmatprep.subr.bf16.mxu0 0
    %318 = vmatpush2.bf16.msra.mxu0 0
    %319 = vmatprep.subr.bf16.mxu0 0
    %320 = vmatpush2.bf16.msra.mxu0 0
    %321 = vmatprep.subr.bf16.mxu0 0
    %322 = vmatpush2.bf16.msra.mxu0 0
    %323 = vmatprep.subr.bf16.mxu0 0
    %324 = vmatpush2.bf16.msra.mxu0 0
    %325 = vmatprep.subr.bf16.mxu0 0
    %326 = vmatpush2.bf16.msra.mxu0 0
    %327 = vmatprep.mubr.bf16.mxu0 0
    %328 = vmatmul.mubr.bf16.gmra.mxu0 %v293
    %v329 = vpop.f32.mrf.mxu0
    %v330 = vadd.f32 %v90, %v329
    %v331 = vpop.f32.mrf.mxu0
    %v332 = vpop.f32.mrf.mxu0
    %v333 = vpop.f32.mrf.mxu0
    %334 = vdwg.mxu0
    %v335 = vxor.u32 %v330, 2147483648
    %v336 = vmul.f32 %v335, 1.442695
    %v337 = vpow.pop %v336
    %v338 = vadd.f32 %v337, 1.0
    %v339 = vrcp.pop %v338
    %v340 = vmul.f32 1.0, %v339
    %v341 = vtanh.pop %v330
    %v342 = vmul.f32 %v340, %v181
    %344 = vrot.lane.b32.xlu0 %v341, 32
    %v345 = vpop.permute.xlu0 %344
    %v347 = vmul.f32 %v340, %v345
    %349 = vrot.lane.b32.xlu0 %v347, 32
    %v350 = vpop.permute.xlu0 %349
    %v352 = vadd.f32 %v342, %v350
    %v353 = vtanh.pop %v352
    %355 = vrot.lane.b32.xlu0 %v353, 32
    %v356 = vpop.permute.xlu0 %355
    %v358 = vmul.f32 %v340, %v356
    %360 = vrot.lane.b32.xlu0 %v358, 64
    %v361 = vpop.permute.xlu0 %360
    %364 = vrot.lane.b32.xlu0 %v284, 96
    %v365 = vpop.permute.xlu0 %364
    %v367 = vsel %vm93, %v361, %v365
    %v368 = vpack.c.bf16 %v367, %v367
    %v370 = vsel %vm120, %v368, 0
    %372 = vmatprep.subr.bf16.mxu0 0
    %373 = vmatpush1.bf16.msra.mxu0 0
    %374 = vmatprep.subr.bf16.mxu0 0
    %375 = vmatpush1.bf16.msra.mxu0 0
    %376 = vmatprep.subr.bf16.mxu0 0
    %377 = vmatpush1.bf16.msra.mxu0 0
    %378 = vmatprep.subr.bf16.mxu0 0
    %379 = vmatpush1.bf16.msra.mxu0 0
    %380 = vmatprep.subr.bf16.mxu0 0
    %381 = vmatpush1.bf16.msra.mxu0 %v213
    %382 = vmatprep.subr.bf16.mxu0 0
    %383 = vmatpush1.bf16.msra.mxu0 %v212
    %384 = vmatprep.subr.bf16.mxu0 0
    %385 = vmatpush1.bf16.msra.mxu0 %v211
    %386 = vmatprep.subr.bf16.mxu0 0
    %387 = vmatpush1.bf16.msra.mxu0 %v210
    %388 = vmatprep.subr.bf16.mxu0 0
    %389 = vmatpush2.bf16.msra.mxu0 0
    %390 = vmatprep.subr.bf16.mxu0 0
    %391 = vmatpush2.bf16.msra.mxu0 0
    %392 = vmatprep.subr.bf16.mxu0 0
    %393 = vmatpush2.bf16.msra.mxu0 0
    %394 = vmatprep.subr.bf16.mxu0 0
    %395 = vmatpush2.bf16.msra.mxu0 0
    %396 = vmatprep.subr.bf16.mxu0 0
    %397 = vmatpush2.bf16.msra.mxu0 0
    %398 = vmatprep.subr.bf16.mxu0 0
    %399 = vmatpush2.bf16.msra.mxu0 0
    %400 = vmatprep.subr.bf16.mxu0 0
    %401 = vmatpush2.bf16.msra.mxu0 0
    %402 = vmatprep.subr.bf16.mxu0 0
    %403 = vmatpush2.bf16.msra.mxu0 0
    %404 = vmatprep.mubr.bf16.mxu0 0
    %405 = vmatmul.mubr.bf16.gmra.mxu0 %v370
    %v406 = vpop.f32.mrf.mxu0
    %v407 = vadd.f32 %v91, %v406
    %v408 = vpop.f32.mrf.mxu0
    %v409 = vpop.f32.mrf.mxu0
    %v410 = vpop.f32.mrf.mxu0
    %411 = vdwg.mxu0
    %v412 = vxor.u32 %v407, 2147483648
    %v413 = vmul.f32 %v412, 1.442695
    %v414 = vpow.pop %v413
    %v415 = vadd.f32 %v414, 1.0
    %v416 = vrcp.pop %v415
    %v417 = vmul.f32 1.0, %v416
    %v418 = vtanh.pop %v407
    %v419 = vmul.f32 %v417, %v278
    %421 = vrot.lane.b32.xlu0 %v418, 32
    %v422 = vpop.permute.xlu0 %421
    %v424 = vmul.f32 %v417, %v422
    %426 = vrot.lane.b32.xlu0 %v424, 32
    %v427 = vpop.permute.xlu0 %426
    %v429 = vadd.f32 %v419, %v427
    %v430 = vtanh.pop %v429
    %432 = vrot.lane.b32.xlu0 %v430, 32
    %v433 = vpop.permute.xlu0 %432
    %v435 = vmul.f32 %v417, %v433
    %s436 = scalar_lea.vmem %s0, 16
    %v437 = vld [vmem:[%s436] sm:$0xff]
    %438 = vrot.lane.b32.xlu0 %v358, 96
    %v439 = vpop.permute.xlu0 %438
    %v441 = vsel %vm93, %v437, %v439
    %v442 = vpack.c.bf16 %v441, %v441
    %v444 = vsel %vm120, %v442, 0
    %446 = vmatprep.subr.bf16.mxu0 0
    %447 = vmatpush1.bf16.msra.mxu0 0
    %448 = vmatprep.subr.bf16.mxu0 0
    %449 = vmatpush1.bf16.msra.mxu0 0
    %450 = vmatprep.subr.bf16.mxu0 0
    %451 = vmatpush1.bf16.msra.mxu0 0
    %452 = vmatprep.subr.bf16.mxu0 0
    %453 = vmatpush1.bf16.msra.mxu0 0
    %454 = vmatprep.subr.bf16.mxu0 0
    %455 = vmatpush1.bf16.msra.mxu0 %v115
    %456 = vmatprep.subr.bf16.mxu0 0
    %457 = vmatpush1.bf16.msra.mxu0 %v114
    %458 = vmatprep.subr.bf16.mxu0 0
    %459 = vmatpush1.bf16.msra.mxu0 %v113
    %460 = vmatprep.subr.bf16.mxu0 0
    %461 = vmatpush1.bf16.msra.mxu0 %v112
    %462 = vmatprep.subr.bf16.mxu0 0
    %463 = vmatpush2.bf16.msra.mxu0 0
    %464 = vmatprep.subr.bf16.mxu0 0
    %465 = vmatpush2.bf16.msra.mxu0 0
    %466 = vmatprep.subr.bf16.mxu0 0
    %467 = vmatpush2.bf16.msra.mxu0 0
    %468 = vmatprep.subr.bf16.mxu0 0
    %469 = vmatpush2.bf16.msra.mxu0 0
    %470 = vmatprep.subr.bf16.mxu0 0
    %471 = vmatpush2.bf16.msra.mxu0 0
    %472 = vmatprep.subr.bf16.mxu0 0
    %473 = vmatpush2.bf16.msra.mxu0 0
    %474 = vmatprep.subr.bf16.mxu0 0
    %475 = vmatpush2.bf16.msra.mxu0 0
    %476 = vmatprep.subr.bf16.mxu0 0
    %477 = vmatpush2.bf16.msra.mxu0 0
    %478 = vmatprep.mubr.bf16.mxu0 0
    %479 = vmatmul.mubr.bf16.gmra.mxu0 %v444
    %v480 = vpop.f32.mrf.mxu0
    %v481 = vadd.f32 %v90, %v480
    %v482 = vpop.f32.mrf.mxu0
    %v483 = vpop.f32.mrf.mxu0
    %v484 = vpop.f32.mrf.mxu0
    %485 = vdwg.mxu0
    %v486 = vxor.u32 %v481, 2147483648
    %v487 = vmul.f32 %v486, 1.442695
    %v488 = vpow.pop %v487
    %v489 = vadd.f32 %v488, 1.0
    %v490 = vrcp.pop %v489
    %v491 = vmul.f32 1.0, %v490
    %v492 = vtanh.pop %v481
    %v493 = vmul.f32 %v491, %v352
    %495 = vrot.lane.b32.xlu0 %v492, 32
    %v496 = vpop.permute.xlu0 %495
    %v498 = vmul.f32 %v491, %v496
    %500 = vrot.lane.b32.xlu0 %v498, 32
    %v501 = vpop.permute.xlu0 %500
    %v503 = vadd.f32 %v493, %v501
    %v504 = vtanh.pop %v503
    %506 = vrot.lane.b32.xlu0 %v504, 32
    %v507 = vpop.permute.xlu0 %506
    %v509 = vmul.f32 %v491, %v507
    %511 = vrot.lane.b32.xlu0 %v509, 64
    %v512 = vpop.permute.xlu0 %511
    %515 = vrot.lane.b32.xlu0 %v435, 96
    %v516 = vpop.permute.xlu0 %515
    %v518 = vsel %vm93, %v512, %v516
    %v519 = vpack.c.bf16 %v518, %v518
    %v521 = vsel %vm120, %v519, 0
    %523 = vmatprep.subr.bf16.mxu0 0
    %524 = vmatpush1.bf16.msra.mxu0 0
    %525 = vmatprep.subr.bf16.mxu0 0
    %526 = vmatpush1.bf16.msra.mxu0 0
    %527 = vmatprep.subr.bf16.mxu0 0
    %528 = vmatpush1.bf16.msra.mxu0 0
    %529 = vmatprep.subr.bf16.mxu0 0
    %530 = vmatpush1.bf16.msra.mxu0 0
    %531 = vmatprep.subr.bf16.mxu0 0
    %532 = vmatpush1.bf16.msra.mxu0 %v213
    %533 = vmatprep.subr.bf16.mxu0 0
    %534 = vmatpush1.bf16.msra.mxu0 %v212
    %535 = vmatprep.subr.bf16.mxu0 0
    %536 = vmatpush1.bf16.msra.mxu0 %v211
    %537 = vmatprep.subr.bf16.mxu0 0
    %538 = vmatpush1.bf16.msra.mxu0 %v210
    %539 = vmatprep.subr.bf16.mxu0 0
    %540 = vmatpush2.bf16.msra.mxu0 0
    %541 = vmatprep.subr.bf16.mxu0 0
    %542 = vmatpush2.bf16.msra.mxu0 0
    %543 = vmatprep.subr.bf16.mxu0 0
    %544 = vmatpush2.bf16.msra.mxu0 0
    %545 = vmatprep.subr.bf16.mxu0 0
    %546 = vmatpush2.bf16.msra.mxu0 0
    %547 = vmatprep.subr.bf16.mxu0 0
    %548 = vmatpush2.bf16.msra.mxu0 0
    %549 = vmatprep.subr.bf16.mxu0 0
    %550 = vmatpush2.bf16.msra.mxu0 0
    %551 = vmatprep.subr.bf16.mxu0 0
    %552 = vmatpush2.bf16.msra.mxu0 0
    %553 = vmatprep.subr.bf16.mxu0 0
    %554 = vmatpush2.bf16.msra.mxu0 0
    %555 = vmatprep.mubr.bf16.mxu0 0
    %556 = vmatmul.mubr.bf16.gmra.mxu0 %v521
    %v557 = vpop.f32.mrf.mxu0
    %v558 = vadd.f32 %v91, %v557
    %v559 = vpop.f32.mrf.mxu0
    %v560 = vpop.f32.mrf.mxu0
    %v561 = vpop.f32.mrf.mxu0
    %562 = vdwg.mxu0
    %v563 = vxor.u32 %v558, 2147483648
    %v564 = vmul.f32 %v563, 1.442695
    %v565 = vpow.pop %v564
    %v566 = vadd.f32 %v565, 1.0
    %v567 = vrcp.pop %v566
    %v568 = vmul.f32 1.0, %v567
    %v569 = vtanh.pop %v558
    %v570 = vmul.f32 %v568, %v429
    %572 = vrot.lane.b32.xlu0 %v569, 32
    %v573 = vpop.permute.xlu0 %572
    %v575 = vmul.f32 %v568, %v573
    %577 = vrot.lane.b32.xlu0 %v575, 32
    %v578 = vpop.permute.xlu0 %577
    %v580 = vadd.f32 %v570, %v578
    %v581 = vtanh.pop %v580
    %583 = vrot.lane.b32.xlu0 %v581, 32
    %v584 = vpop.permute.xlu0 %583
    %v586 = vmul.f32 %v568, %v584
    %s587 = scalar_lea.vmem %s0, 24
    %v588 = vld [vmem:[%s587] sm:$0xff]
    %589 = vrot.lane.b32.xlu0 %v509, 96
    %v590 = vpop.permute.xlu0 %589
    %v592 = vsel %vm93, %v588, %v590
    %v593 = vpack.c.bf16 %v592, %v592
    %v595 = vsel %vm120, %v593, 0
    %597 = vmatprep.subr.bf16.mxu0 0
    %598 = vmatpush1.bf16.msra.mxu0 0
    %599 = vmatprep.subr.bf16.mxu0 0
    %600 = vmatpush1.bf16.msra.mxu0 0
    %601 = vmatprep.subr.bf16.mxu0 0
    %602 = vmatpush1.bf16.msra.mxu0 0
    %603 = vmatprep.subr.bf16.mxu0 0
    %604 = vmatpush1.bf16.msra.mxu0 0
    %605 = vmatprep.subr.bf16.mxu0 0
    %606 = vmatpush1.bf16.msra.mxu0 %v115
    %607 = vmatprep.subr.bf16.mxu0 0
    %608 = vmatpush1.bf16.msra.mxu0 %v114
    %609 = vmatprep.subr.bf16.mxu0 0
    %610 = vmatpush1.bf16.msra.mxu0 %v113
    %611 = vmatprep.subr.bf16.mxu0 0
    %612 = vmatpush1.bf16.msra.mxu0 %v112
    %613 = vmatprep.subr.bf16.mxu0 0
    %614 = vmatpush2.bf16.msra.mxu0 0
    %615 = vmatprep.subr.bf16.mxu0 0
    %616 = vmatpush2.bf16.msra.mxu0 0
    %617 = vmatprep.subr.bf16.mxu0 0
    %618 = vmatpush2.bf16.msra.mxu0 0
    %619 = vmatprep.subr.bf16.mxu0 0
    %620 = vmatpush2.bf16.msra.mxu0 0
    %621 = vmatprep.subr.bf16.mxu0 0
    %622 = vmatpush2.bf16.msra.mxu0 0
    %623 = vmatprep.subr.bf16.mxu0 0
    %624 = vmatpush2.bf16.msra.mxu0 0
    %625 = vmatprep.subr.bf16.mxu0 0
    %626 = vmatpush2.bf16.msra.mxu0 0
    %627 = vmatprep.subr.bf16.mxu0 0
    %628 = vmatpush2.bf16.msra.mxu0 0
    %629 = vmatprep.mubr.bf16.mxu0 0
    %630 = vmatmul.mubr.bf16.gmra.mxu0 %v595
    %v631 = vpop.f32.mrf.mxu0
    %v632 = vadd.f32 %v90, %v631
    %v633 = vpop.f32.mrf.mxu0
    %v634 = vpop.f32.mrf.mxu0
    %v635 = vpop.f32.mrf.mxu0
    %636 = vdwg.mxu0
    %v637 = vxor.u32 %v632, 2147483648
    %v638 = vmul.f32 %v637, 1.442695
    %v639 = vpow.pop %v638
    %v640 = vadd.f32 %v639, 1.0
    %v641 = vrcp.pop %v640
    %v642 = vmul.f32 1.0, %v641
    %v643 = vtanh.pop %v632
    %v644 = vmul.f32 %v642, %v503
    %646 = vrot.lane.b32.xlu0 %v643, 32
    %v647 = vpop.permute.xlu0 %646
    %v649 = vmul.f32 %v642, %v647
    %651 = vrot.lane.b32.xlu0 %v649, 32
    %v652 = vpop.permute.xlu0 %651
    %v654 = vadd.f32 %v644, %v652
    %v655 = vtanh.pop %v654
    %657 = vrot.lane.b32.xlu0 %v655, 32
    %v658 = vpop.permute.xlu0 %657
    %v660 = vmul.f32 %v642, %v658
    %662 = vrot.lane.b32.xlu0 %v660, 64
    %v663 = vpop.permute.xlu0 %662
    %666 = vrot.lane.b32.xlu0 %v586, 96
    %v667 = vpop.permute.xlu0 %666
    %v669 = vsel %vm93, %v663, %v667
    %v670 = vpack.c.bf16 %v669, %v669
    %v672 = vsel %vm120, %v670, 0
    %674 = vmatprep.subr.bf16.mxu0 0
    %675 = vmatpush1.bf16.msra.mxu0 0
    %676 = vmatprep.subr.bf16.mxu0 0
    %677 = vmatpush1.bf16.msra.mxu0 0
    %678 = vmatprep.subr.bf16.mxu0 0
    %679 = vmatpush1.bf16.msra.mxu0 0
    %680 = vmatprep.subr.bf16.mxu0 0
    %681 = vmatpush1.bf16.msra.mxu0 0
    %682 = vmatprep.subr.bf16.mxu0 0
    %683 = vmatpush1.bf16.msra.mxu0 %v213
    %684 = vmatprep.subr.bf16.mxu0 0
    %685 = vmatpush1.bf16.msra.mxu0 %v212
    %686 = vmatprep.subr.bf16.mxu0 0
    %687 = vmatpush1.bf16.msra.mxu0 %v211
    %688 = vmatprep.subr.bf16.mxu0 0
    %689 = vmatpush1.bf16.msra.mxu0 %v210
    %690 = vmatprep.subr.bf16.mxu0 0
    %691 = vmatpush2.bf16.msra.mxu0 0
    %692 = vmatprep.subr.bf16.mxu0 0
    %693 = vmatpush2.bf16.msra.mxu0 0
    %694 = vmatprep.subr.bf16.mxu0 0
    %695 = vmatpush2.bf16.msra.mxu0 0
    %696 = vmatprep.subr.bf16.mxu0 0
    %697 = vmatpush2.bf16.msra.mxu0 0
    %698 = vmatprep.subr.bf16.mxu0 0
    %699 = vmatpush2.bf16.msra.mxu0 0
    %700 = vmatprep.subr.bf16.mxu0 0
    %701 = vmatpush2.bf16.msra.mxu0 0
    %702 = vmatprep.subr.bf16.mxu0 0
    %703 = vmatpush2.bf16.msra.mxu0 0
    %704 = vmatprep.subr.bf16.mxu0 0
    %705 = vmatpush2.bf16.msra.mxu0 0
    %706 = vmatprep.mubr.bf16.mxu0 0
    %707 = vmatmul.mubr.bf16.gmra.mxu0 %v672
    %v708 = vpop.f32.mrf.mxu0
    %v709 = vadd.f32 %v91, %v708
    %v710 = vpop.f32.mrf.mxu0
    %v711 = vpop.f32.mrf.mxu0
    %v712 = vpop.f32.mrf.mxu0
    %713 = vdwg.mxu0
    %v714 = vxor.u32 %v709, 2147483648
    %v715 = vmul.f32 %v714, 1.442695
    %v716 = vpow.pop %v715
    %v717 = vadd.f32 %v716, 1.0
    %v718 = vrcp.pop %v717
    %v719 = vmul.f32 1.0, %v718
    %v720 = vtanh.pop %v709
    %v721 = vmul.f32 %v719, %v580
    %723 = vrot.lane.b32.xlu0 %v720, 32
    %v724 = vpop.permute.xlu0 %723
    %v726 = vmul.f32 %v719, %v724
    %728 = vrot.lane.b32.xlu0 %v726, 32
    %v729 = vpop.permute.xlu0 %728
    %v731 = vadd.f32 %v721, %v729
    %v732 = vtanh.pop %v731
    %734 = vrot.lane.b32.xlu0 %v732, 32
    %v735 = vpop.permute.xlu0 %734
    %v737 = vmul.f32 %v719, %v735
    %s738 = scalar_lea.vmem %s0, 32
    %v739 = vld [vmem:[%s738] sm:$0xff]
    %740 = vrot.lane.b32.xlu0 %v660, 96
    %v741 = vpop.permute.xlu0 %740
    %v743 = vsel %vm93, %v739, %v741
    %v744 = vpack.c.bf16 %v743, %v743
    %v746 = vsel %vm120, %v744, 0
    %748 = vmatprep.subr.bf16.mxu0 0
    %749 = vmatpush1.bf16.msra.mxu0 0
    %750 = vmatprep.subr.bf16.mxu0 0
    %751 = vmatpush1.bf16.msra.mxu0 0
    %752 = vmatprep.subr.bf16.mxu0 0
    %753 = vmatpush1.bf16.msra.mxu0 0
    %754 = vmatprep.subr.bf16.mxu0 0
    %755 = vmatpush1.bf16.msra.mxu0 0
    %756 = vmatprep.subr.bf16.mxu0 0
    %757 = vmatpush1.bf16.msra.mxu0 %v115
    %758 = vmatprep.subr.bf16.mxu0 0
    %759 = vmatpush1.bf16.msra.mxu0 %v114
    %760 = vmatprep.subr.bf16.mxu0 0
    %761 = vmatpush1.bf16.msra.mxu0 %v113
    %762 = vmatprep.subr.bf16.mxu0 0
    %763 = vmatpush1.bf16.msra.mxu0 %v112
    %764 = vmatprep.subr.bf16.mxu0 0
    %765 = vmatpush2.bf16.msra.mxu0 0
    %766 = vmatprep.subr.bf16.mxu0 0
    %767 = vmatpush2.bf16.msra.mxu0 0
    %768 = vmatprep.subr.bf16.mxu0 0
    %769 = vmatpush2.bf16.msra.mxu0 0
    %770 = vmatprep.subr.bf16.mxu0 0
    %771 = vmatpush2.bf16.msra.mxu0 0
    %772 = vmatprep.subr.bf16.mxu0 0
    %773 = vmatpush2.bf16.msra.mxu0 0
    %774 = vmatprep.subr.bf16.mxu0 0
    %775 = vmatpush2.bf16.msra.mxu0 0
    %776 = vmatprep.subr.bf16.mxu0 0
    %777 = vmatpush2.bf16.msra.mxu0 0
    %778 = vmatprep.subr.bf16.mxu0 0
    %779 = vmatpush2.bf16.msra.mxu0 0
    %780 = vmatprep.mubr.bf16.mxu0 0
    %781 = vmatmul.mubr.bf16.gmra.mxu0 %v746
    %v782 = vpop.f32.mrf.mxu0
    %v783 = vadd.f32 %v90, %v782
    %v784 = vpop.f32.mrf.mxu0
    %v785 = vpop.f32.mrf.mxu0
    %v786 = vpop.f32.mrf.mxu0
    %787 = vdwg.mxu0
    %v788 = vxor.u32 %v783, 2147483648
    %v789 = vmul.f32 %v788, 1.442695
    %v790 = vpow.pop %v789
    %v791 = vadd.f32 %v790, 1.0
    %v792 = vrcp.pop %v791
    %v793 = vmul.f32 1.0, %v792
    %v794 = vtanh.pop %v783
    %v795 = vmul.f32 %v793, %v654
    %797 = vrot.lane.b32.xlu0 %v794, 32
    %v798 = vpop.permute.xlu0 %797
    %v800 = vmul.f32 %v793, %v798
    %802 = vrot.lane.b32.xlu0 %v800, 32
    %v803 = vpop.permute.xlu0 %802
    %v805 = vadd.f32 %v795, %v803
    %v806 = vtanh.pop %v805
    %808 = vrot.lane.b32.xlu0 %v806, 32
    %v809 = vpop.permute.xlu0 %808
    %v811 = vmul.f32 %v793, %v809
    %813 = vrot.lane.b32.xlu0 %v811, 64
    %v814 = vpop.permute.xlu0 %813
    %817 = vrot.lane.b32.xlu0 %v737, 96
    %v818 = vpop.permute.xlu0 %817
    %v820 = vsel %vm93, %v814, %v818
    %v821 = vpack.c.bf16 %v820, %v820
    %v823 = vsel %vm120, %v821, 0
    %825 = vmatprep.subr.bf16.mxu0 0
    %826 = vmatpush1.bf16.msra.mxu0 0
    %827 = vmatprep.subr.bf16.mxu0 0
    %828 = vmatpush1.bf16.msra.mxu0 0
    %829 = vmatprep.subr.bf16.mxu0 0
    %830 = vmatpush1.bf16.msra.mxu0 0
    %831 = vmatprep.subr.bf16.mxu0 0
    %832 = vmatpush1.bf16.msra.mxu0 0
    %833 = vmatprep.subr.bf16.mxu0 0
    %834 = vmatpush1.bf16.msra.mxu0 %v213
    %835 = vmatprep.subr.bf16.mxu0 0
    %836 = vmatpush1.bf16.msra.mxu0 %v212
    %837 = vmatprep.subr.bf16.mxu0 0
    %838 = vmatpush1.bf16.msra.mxu0 %v211
    %839 = vmatprep.subr.bf16.mxu0 0
    %840 = vmatpush1.bf16.msra.mxu0 %v210
    %841 = vmatprep.subr.bf16.mxu0 0
    %842 = vmatpush2.bf16.msra.mxu0 0
    %843 = vmatprep.subr.bf16.mxu0 0
    %844 = vmatpush2.bf16.msra.mxu0 0
    %845 = vmatprep.subr.bf16.mxu0 0
    %846 = vmatpush2.bf16.msra.mxu0 0
    %847 = vmatprep.subr.bf16.mxu0 0
    %848 = vmatpush2.bf16.msra.mxu0 0
    %849 = vmatprep.subr.bf16.mxu0 0
    %850 = vmatpush2.bf16.msra.mxu0 0
    %851 = vmatprep.subr.bf16.mxu0 0
    %852 = vmatpush2.bf16.msra.mxu0 0
    %853 = vmatprep.subr.bf16.mxu0 0
    %854 = vmatpush2.bf16.msra.mxu0 0
    %855 = vmatprep.subr.bf16.mxu0 0
    %856 = vmatpush2.bf16.msra.mxu0 0
    %857 = vmatprep.mubr.bf16.mxu0 0
    %858 = vmatmul.mubr.bf16.gmra.mxu0 %v823
    %v859 = vpop.f32.mrf.mxu0
    %v860 = vadd.f32 %v91, %v859
    %v861 = vpop.f32.mrf.mxu0
    %v862 = vpop.f32.mrf.mxu0
    %v863 = vpop.f32.mrf.mxu0
    %864 = vdwg.mxu0
    %v865 = vxor.u32 %v860, 2147483648
    %v866 = vmul.f32 %v865, 1.442695
    %v867 = vpow.pop %v866
    %v868 = vadd.f32 %v867, 1.0
    %v869 = vrcp.pop %v868
    %v870 = vmul.f32 1.0, %v869
    %v871 = vtanh.pop %v860
    %v872 = vmul.f32 %v870, %v731
    %874 = vrot.lane.b32.xlu0 %v871, 32
    %v875 = vpop.permute.xlu0 %874
    %v877 = vmul.f32 %v870, %v875
    %879 = vrot.lane.b32.xlu0 %v877, 32
    %v880 = vpop.permute.xlu0 %879
    %v882 = vadd.f32 %v872, %v880
    %v883 = vtanh.pop %v882
    %885 = vrot.lane.b32.xlu0 %v883, 32
    %v886 = vpop.permute.xlu0 %885
    %v888 = vmul.f32 %v870, %v886
    %s889 = scalar_lea.vmem %s0, 40
    %v890 = vld [vmem:[%s889] sm:$0xff]
    %891 = vrot.lane.b32.xlu0 %v811, 96
    %v892 = vpop.permute.xlu0 %891
    %v894 = vsel %vm93, %v890, %v892
    %v895 = vpack.c.bf16 %v894, %v894
    %v897 = vsel %vm120, %v895, 0
    %899 = vmatprep.subr.bf16.mxu0 0
    %900 = vmatpush1.bf16.msra.mxu0 0
    %901 = vmatprep.subr.bf16.mxu0 0
    %902 = vmatpush1.bf16.msra.mxu0 0
    %903 = vmatprep.subr.bf16.mxu0 0
    %904 = vmatpush1.bf16.msra.mxu0 0
    %905 = vmatprep.subr.bf16.mxu0 0
    %906 = vmatpush1.bf16.msra.mxu0 0
    %907 = vmatprep.subr.bf16.mxu0 0
    %908 = vmatpush1.bf16.msra.mxu0 %v115
    %909 = vmatprep.subr.bf16.mxu0 0
    %910 = vmatpush1.bf16.msra.mxu0 %v114
    %911 = vmatprep.subr.bf16.mxu0 0
    %912 = vmatpush1.bf16.msra.mxu0 %v113
    %913 = vmatprep.subr.bf16.mxu0 0
    %914 = vmatpush1.bf16.msra.mxu0 %v112
    %915 = vmatprep.subr.bf16.mxu0 0
    %916 = vmatpush2.bf16.msra.mxu0 0
    %917 = vmatprep.subr.bf16.mxu0 0
    %918 = vmatpush2.bf16.msra.mxu0 0
    %919 = vmatprep.subr.bf16.mxu0 0
    %920 = vmatpush2.bf16.msra.mxu0 0
    %921 = vmatprep.subr.bf16.mxu0 0
    %922 = vmatpush2.bf16.msra.mxu0 0
    %923 = vmatprep.subr.bf16.mxu0 0
    %924 = vmatpush2.bf16.msra.mxu0 0
    %925 = vmatprep.subr.bf16.mxu0 0
    %926 = vmatpush2.bf16.msra.mxu0 0
    %927 = vmatprep.subr.bf16.mxu0 0
    %928 = vmatpush2.bf16.msra.mxu0 0
    %929 = vmatprep.subr.bf16.mxu0 0
    %930 = vmatpush2.bf16.msra.mxu0 0
    %931 = vmatprep.mubr.bf16.mxu0 0
    %932 = vmatmul.mubr.bf16.gmra.mxu0 %v897
    %v933 = vpop.f32.mrf.mxu0
    %v934 = vadd.f32 %v90, %v933
    %v935 = vpop.f32.mrf.mxu0
    %v936 = vpop.f32.mrf.mxu0
    %v937 = vpop.f32.mrf.mxu0
    %938 = vdwg.mxu0
    %v939 = vxor.u32 %v934, 2147483648
    %v940 = vmul.f32 %v939, 1.442695
    %v941 = vpow.pop %v940
    %v942 = vadd.f32 %v941, 1.0
    %v943 = vrcp.pop %v942
    %v944 = vmul.f32 1.0, %v943
    %v945 = vtanh.pop %v934
    %v946 = vmul.f32 %v944, %v805
    %948 = vrot.lane.b32.xlu0 %v945, 32
    %v949 = vpop.permute.xlu0 %948
    %v951 = vmul.f32 %v944, %v949
    %953 = vrot.lane.b32.xlu0 %v951, 32
    %v954 = vpop.permute.xlu0 %953
    %v956 = vadd.f32 %v946, %v954
    %v957 = vtanh.pop %v956
    %959 = vrot.lane.b32.xlu0 %v957, 32
    %v960 = vpop.permute.xlu0 %959
    %v962 = vmul.f32 %v944, %v960
    %964 = vrot.lane.b32.xlu0 %v962, 64
    %v965 = vpop.permute.xlu0 %964
    %968 = vrot.lane.b32.xlu0 %v888, 96
    %v969 = vpop.permute.xlu0 %968
    %v971 = vsel %vm93, %v965, %v969
    %v972 = vpack.c.bf16 %v971, %v971
    %v974 = vsel %vm120, %v972, 0
    %976 = vmatprep.subr.bf16.mxu0 0
    %977 = vmatpush1.bf16.msra.mxu0 0
    %978 = vmatprep.subr.bf16.mxu0 0
    %979 = vmatpush1.bf16.msra.mxu0 0
    %980 = vmatprep.subr.bf16.mxu0 0
    %981 = vmatpush1.bf16.msra.mxu0 0
    %982 = vmatprep.subr.bf16.mxu0 0
    %983 = vmatpush1.bf16.msra.mxu0 0
    %984 = vmatprep.subr.bf16.mxu0 0
    %985 = vmatpush1.bf16.msra.mxu0 %v213
    %986 = vmatprep.subr.bf16.mxu0 0
    %987 = vmatpush1.bf16.msra.mxu0 %v212
    %988 = vmatprep.subr.bf16.mxu0 0
    %989 = vmatpush1.bf16.msra.mxu0 %v211
    %990 = vmatprep.subr.bf16.mxu0 0
    %991 = vmatpush1.bf16.msra.mxu0 %v210
    %992 = vmatprep.subr.bf16.mxu0 0
    %993 = vmatpush2.bf16.msra.mxu0 0
    %994 = vmatprep.subr.bf16.mxu0 0
    %995 = vmatpush2.bf16.msra.mxu0 0
    %996 = vmatprep.subr.bf16.mxu0 0
    %997 = vmatpush2.bf16.msra.mxu0 0
    %998 = vmatprep.subr.bf16.mxu0 0
    %999 = vmatpush2.bf16.msra.mxu0 0
    %1000 = vmatprep.subr.bf16.mxu0 0
    %1001 = vmatpush2.bf16.msra.mxu0 0
    %1002 = vmatprep.subr.bf16.mxu0 0
    %1003 = vmatpush2.bf16.msra.mxu0 0
    %1004 = vmatprep.subr.bf16.mxu0 0
    %1005 = vmatpush2.bf16.msra.mxu0 0
    %1006 = vmatprep.subr.bf16.mxu0 0
    %1007 = vmatpush2.bf16.msra.mxu0 0
    %1008 = vmatprep.mubr.bf16.mxu0 0
    %1009 = vmatmul.mubr.bf16.gmra.mxu0 %v974
    %v1010 = vpop.f32.mrf.mxu0
    %v1011 = vadd.f32 %v91, %v1010
    %v1012 = vpop.f32.mrf.mxu0
    %v1013 = vpop.f32.mrf.mxu0
    %v1014 = vpop.f32.mrf.mxu0
    %1015 = vdwg.mxu0
    %v1016 = vxor.u32 %v1011, 2147483648
    %v1017 = vmul.f32 %v1016, 1.442695
    %v1018 = vpow.pop %v1017
    %v1019 = vadd.f32 %v1018, 1.0
    %v1020 = vrcp.pop %v1019
    %v1021 = vmul.f32 1.0, %v1020
    %v1022 = vtanh.pop %v1011
    %v1023 = vmul.f32 %v1021, %v882
    %1025 = vrot.lane.b32.xlu0 %v1022, 32
    %v1026 = vpop.permute.xlu0 %1025
    %v1028 = vmul.f32 %v1021, %v1026
    %1030 = vrot.lane.b32.xlu0 %v1028, 32
    %v1031 = vpop.permute.xlu0 %1030
    %v1033 = vadd.f32 %v1023, %v1031
    %v1034 = vtanh.pop %v1033
    %1036 = vrot.lane.b32.xlu0 %v1034, 32
    %v1037 = vpop.permute.xlu0 %1036
    %v1039 = vmul.f32 %v1021, %v1037
    %s1040 = scalar_lea.vmem %s0, 48
    %v1041 = vld [vmem:[%s1040] sm:$0xff]
    %1042 = vrot.lane.b32.xlu0 %v962, 96
    %v1043 = vpop.permute.xlu0 %1042
    %v1045 = vsel %vm93, %v1041, %v1043
    %v1046 = vpack.c.bf16 %v1045, %v1045
    %v1048 = vsel %vm120, %v1046, 0
    %1050 = vmatprep.subr.bf16.mxu0 0
    %1051 = vmatpush1.bf16.msra.mxu0 0
    %1052 = vmatprep.subr.bf16.mxu0 0
    %1053 = vmatpush1.bf16.msra.mxu0 0
    %1054 = vmatprep.subr.bf16.mxu0 0
    %1055 = vmatpush1.bf16.msra.mxu0 0
    %1056 = vmatprep.subr.bf16.mxu0 0
    %1057 = vmatpush1.bf16.msra.mxu0 0
    %1058 = vmatprep.subr.bf16.mxu0 0
    %1059 = vmatpush1.bf16.msra.mxu0 %v115
    %1060 = vmatprep.subr.bf16.mxu0 0
    %1061 = vmatpush1.bf16.msra.mxu0 %v114
    %1062 = vmatprep.subr.bf16.mxu0 0
    %1063 = vmatpush1.bf16.msra.mxu0 %v113
    %1064 = vmatprep.subr.bf16.mxu0 0
    %1065 = vmatpush1.bf16.msra.mxu0 %v112
    %1066 = vmatprep.subr.bf16.mxu0 0
    %1067 = vmatpush2.bf16.msra.mxu0 0
    %1068 = vmatprep.subr.bf16.mxu0 0
    %1069 = vmatpush2.bf16.msra.mxu0 0
    %1070 = vmatprep.subr.bf16.mxu0 0
    %1071 = vmatpush2.bf16.msra.mxu0 0
    %1072 = vmatprep.subr.bf16.mxu0 0
    %1073 = vmatpush2.bf16.msra.mxu0 0
    %1074 = vmatprep.subr.bf16.mxu0 0
    %1075 = vmatpush2.bf16.msra.mxu0 0
    %1076 = vmatprep.subr.bf16.mxu0 0
    %1077 = vmatpush2.bf16.msra.mxu0 0
    %1078 = vmatprep.subr.bf16.mxu0 0
    %1079 = vmatpush2.bf16.msra.mxu0 0
    %1080 = vmatprep.subr.bf16.mxu0 0
    %1081 = vmatpush2.bf16.msra.mxu0 0
    %1082 = vmatprep.mubr.bf16.mxu0 0
    %1083 = vmatmul.mubr.bf16.gmra.mxu0 %v1048
    %v1084 = vpop.f32.mrf.mxu0
    %v1085 = vadd.f32 %v90, %v1084
    %v1086 = vpop.f32.mrf.mxu0
    %v1087 = vpop.f32.mrf.mxu0
    %v1088 = vpop.f32.mrf.mxu0
    %1089 = vdwg.mxu0
    %v1090 = vxor.u32 %v1085, 2147483648
    %v1091 = vmul.f32 %v1090, 1.442695
    %v1092 = vpow.pop %v1091
    %v1093 = vadd.f32 %v1092, 1.0
    %v1094 = vrcp.pop %v1093
    %v1095 = vmul.f32 1.0, %v1094
    %v1096 = vtanh.pop %v1085
    %v1097 = vmul.f32 %v1095, %v956
    %1099 = vrot.lane.b32.xlu0 %v1096, 32
    %v1100 = vpop.permute.xlu0 %1099
    %v1102 = vmul.f32 %v1095, %v1100
    %1104 = vrot.lane.b32.xlu0 %v1102, 32
    %v1105 = vpop.permute.xlu0 %1104
    %v1107 = vadd.f32 %v1097, %v1105
    %v1108 = vtanh.pop %v1107
    %1110 = vrot.lane.b32.xlu0 %v1108, 32
    %v1111 = vpop.permute.xlu0 %1110
    %v1113 = vmul.f32 %v1095, %v1111
    %1115 = vrot.lane.b32.xlu0 %v1113, 64
    %v1116 = vpop.permute.xlu0 %1115
    %1119 = vrot.lane.b32.xlu0 %v1039, 96
    %v1120 = vpop.permute.xlu0 %1119
    %v1122 = vsel %vm93, %v1116, %v1120
    %v1123 = vpack.c.bf16 %v1122, %v1122
    %v1125 = vsel %vm120, %v1123, 0
    %1127 = vmatprep.subr.bf16.mxu0 0
    %1128 = vmatpush1.bf16.msra.mxu0 0
    %1129 = vmatprep.subr.bf16.mxu0 0
    %1130 = vmatpush1.bf16.msra.mxu0 0
    %1131 = vmatprep.subr.bf16.mxu0 0
    %1132 = vmatpush1.bf16.msra.mxu0 0
    %1133 = vmatprep.subr.bf16.mxu0 0
    %1134 = vmatpush1.bf16.msra.mxu0 0
    %1135 = vmatprep.subr.bf16.mxu0 0
    %1136 = vmatpush1.bf16.msra.mxu0 %v213
    %1137 = vmatprep.subr.bf16.mxu0 0
    %1138 = vmatpush1.bf16.msra.mxu0 %v212
    %1139 = vmatprep.subr.bf16.mxu0 0
    %1140 = vmatpush1.bf16.msra.mxu0 %v211
    %1141 = vmatprep.subr.bf16.mxu0 0
    %1142 = vmatpush1.bf16.msra.mxu0 %v210
    %1143 = vmatprep.subr.bf16.mxu0 0
    %1144 = vmatpush2.bf16.msra.mxu0 0
    %1145 = vmatprep.subr.bf16.mxu0 0
    %1146 = vmatpush2.bf16.msra.mxu0 0
    %1147 = vmatprep.subr.bf16.mxu0 0
    %1148 = vmatpush2.bf16.msra.mxu0 0
    %1149 = vmatprep.subr.bf16.mxu0 0
    %1150 = vmatpush2.bf16.msra.mxu0 0
    %1151 = vmatprep.subr.bf16.mxu0 0
    %1152 = vmatpush2.bf16.msra.mxu0 0
    %1153 = vmatprep.subr.bf16.mxu0 0
    %1154 = vmatpush2.bf16.msra.mxu0 0
    %1155 = vmatprep.subr.bf16.mxu0 0
    %1156 = vmatpush2.bf16.msra.mxu0 0
    %1157 = vmatprep.subr.bf16.mxu0 0
    %1158 = vmatpush2.bf16.msra.mxu0 0
    %1159 = vmatprep.mubr.bf16.mxu0 0
    %1160 = vmatmul.mubr.bf16.gmra.mxu0 %v1125
    %v1161 = vpop.f32.mrf.mxu0
    %v1162 = vadd.f32 %v91, %v1161
    %v1163 = vpop.f32.mrf.mxu0
    %v1164 = vpop.f32.mrf.mxu0
    %v1165 = vpop.f32.mrf.mxu0
    %1166 = vdwg.mxu0
    %v1167 = vxor.u32 %v1162, 2147483648
    %v1168 = vmul.f32 %v1167, 1.442695
    %v1169 = vpow.pop %v1168
    %v1170 = vadd.f32 %v1169, 1.0
    %v1171 = vrcp.pop %v1170
    %v1172 = vmul.f32 1.0, %v1171
    %v1173 = vtanh.pop %v1162
    %v1174 = vmul.f32 %v1172, %v1033
    %1176 = vrot.lane.b32.xlu0 %v1173, 32
    %v1177 = vpop.permute.xlu0 %1176
    %v1179 = vmul.f32 %v1172, %v1177
    %1181 = vrot.lane.b32.xlu0 %v1179, 32
    %v1182 = vpop.permute.xlu0 %1181
    %v1184 = vadd.f32 %v1174, %v1182
    %v1185 = vtanh.pop %v1184
    %1187 = vrot.lane.b32.xlu0 %v1185, 32
    %v1188 = vpop.permute.xlu0 %1187
    %v1190 = vmul.f32 %v1172, %v1188
    %s1191 = scalar_lea.vmem %s0, 56
    %v1192 = vld [vmem:[%s1191] sm:$0xff]
    %1193 = vrot.lane.b32.xlu0 %v1113, 96
    %v1194 = vpop.permute.xlu0 %1193
    %v1196 = vsel %vm93, %v1192, %v1194
    %v1197 = vpack.c.bf16 %v1196, %v1196
    %v1199 = vsel %vm120, %v1197, 0
    %1201 = vmatprep.subr.bf16.mxu0 0
    %1202 = vmatpush1.bf16.msra.mxu0 0
    %1203 = vmatprep.subr.bf16.mxu0 0
    %1204 = vmatpush1.bf16.msra.mxu0 0
    %1205 = vmatprep.subr.bf16.mxu0 0
    %1206 = vmatpush1.bf16.msra.mxu0 0
    %1207 = vmatprep.subr.bf16.mxu0 0
    %1208 = vmatpush1.bf16.msra.mxu0 0
    %1209 = vmatprep.subr.bf16.mxu0 0
    %1210 = vmatpush1.bf16.msra.mxu0 %v115
    %1211 = vmatprep.subr.bf16.mxu0 0
    %1212 = vmatpush1.bf16.msra.mxu0 %v114
    %1213 = vmatprep.subr.bf16.mxu0 0
    %1214 = vmatpush1.bf16.msra.mxu0 %v113
    %1215 = vmatprep.subr.bf16.mxu0 0
    %1216 = vmatpush1.bf16.msra.mxu0 %v112
    %1217 = vmatprep.subr.bf16.mxu0 0
    %1218 = vmatpush2.bf16.msra.mxu0 0
    %1219 = vmatprep.subr.bf16.mxu0 0
    %1220 = vmatpush2.bf16.msra.mxu0 0
    %1221 = vmatprep.subr.bf16.mxu0 0
    %1222 = vmatpush2.bf16.msra.mxu0 0
    %1223 = vmatprep.subr.bf16.mxu0 0
    %1224 = vmatpush2.bf16.msra.mxu0 0
    %1225 = vmatprep.subr.bf16.mxu0 0
    %1226 = vmatpush2.bf16.msra.mxu0 0
    %1227 = vmatprep.subr.bf16.mxu0 0
    %1228 = vmatpush2.bf16.msra.mxu0 0
    %1229 = vmatprep.subr.bf16.mxu0 0
    %1230 = vmatpush2.bf16.msra.mxu0 0
    %1231 = vmatprep.subr.bf16.mxu0 0
    %1232 = vmatpush2.bf16.msra.mxu0 0
    %1233 = vmatprep.mubr.bf16.mxu0 0
    %1234 = vmatmul.mubr.bf16.gmra.mxu0 %v1199
    %v1235 = vpop.f32.mrf.mxu0
    %v1236 = vadd.f32 %v90, %v1235
    %v1237 = vpop.f32.mrf.mxu0
    %v1238 = vpop.f32.mrf.mxu0
    %v1239 = vpop.f32.mrf.mxu0
    %1240 = vdwg.mxu0
    %v1241 = vxor.u32 %v1236, 2147483648
    %v1242 = vmul.f32 %v1241, 1.442695
    %v1243 = vpow.pop %v1242
    %v1244 = vadd.f32 %v1243, 1.0
    %v1245 = vrcp.pop %v1244
    %v1246 = vmul.f32 1.0, %v1245
    %v1247 = vtanh.pop %v1236
    %v1248 = vmul.f32 %v1246, %v1107
    %1250 = vrot.lane.b32.xlu0 %v1247, 32
    %v1251 = vpop.permute.xlu0 %1250
    %v1253 = vmul.f32 %v1246, %v1251
    %1255 = vrot.lane.b32.xlu0 %v1253, 32
    %v1256 = vpop.permute.xlu0 %1255
    %v1258 = vadd.f32 %v1248, %v1256
    %v1259 = vtanh.pop %v1258
    %1261 = vrot.lane.b32.xlu0 %v1259, 32
    %v1262 = vpop.permute.xlu0 %1261
    %v1264 = vmul.f32 %v1246, %v1262
    %1266 = vrot.lane.b32.xlu0 %v1264, 64
    %v1267 = vpop.permute.xlu0 %1266
    %1270 = vrot.lane.b32.xlu0 %v1190, 96
    %v1271 = vpop.permute.xlu0 %1270
    %v1273 = vsel %vm93, %v1267, %v1271
    %v1274 = vpack.c.bf16 %v1273, %v1273
    %v1276 = vsel %vm120, %v1274, 0
    %1278 = vmatprep.subr.bf16.mxu0 0
    %1279 = vmatpush1.bf16.msra.mxu0 0
    %1280 = vmatprep.subr.bf16.mxu0 0
    %1281 = vmatpush1.bf16.msra.mxu0 0
    %1282 = vmatprep.subr.bf16.mxu0 0
    %1283 = vmatpush1.bf16.msra.mxu0 0
    %1284 = vmatprep.subr.bf16.mxu0 0
    %1285 = vmatpush1.bf16.msra.mxu0 0
    %1286 = vmatprep.subr.bf16.mxu0 0
    %1287 = vmatpush1.bf16.msra.mxu0 %v213
    %1288 = vmatprep.subr.bf16.mxu0 0
    %1289 = vmatpush1.bf16.msra.mxu0 %v212
    %1290 = vmatprep.subr.bf16.mxu0 0
    %1291 = vmatpush1.bf16.msra.mxu0 %v211
    %1292 = vmatprep.subr.bf16.mxu0 0
    %1293 = vmatpush1.bf16.msra.mxu0 %v210
    %1294 = vmatprep.subr.bf16.mxu0 0
    %1295 = vmatpush2.bf16.msra.mxu0 0
    %1296 = vmatprep.subr.bf16.mxu0 0
    %1297 = vmatpush2.bf16.msra.mxu0 0
    %1298 = vmatprep.subr.bf16.mxu0 0
    %1299 = vmatpush2.bf16.msra.mxu0 0
    %1300 = vmatprep.subr.bf16.mxu0 0
    %1301 = vmatpush2.bf16.msra.mxu0 0
    %1302 = vmatprep.subr.bf16.mxu0 0
    %1303 = vmatpush2.bf16.msra.mxu0 0
    %1304 = vmatprep.subr.bf16.mxu0 0
    %1305 = vmatpush2.bf16.msra.mxu0 0
    %1306 = vmatprep.subr.bf16.mxu0 0
    %1307 = vmatpush2.bf16.msra.mxu0 0
    %1308 = vmatprep.subr.bf16.mxu0 0
    %1309 = vmatpush2.bf16.msra.mxu0 0
    %1310 = vmatprep.mubr.bf16.mxu0 0
    %1311 = vmatmul.mubr.bf16.gmra.mxu0 %v1276
    %v1312 = vpop.f32.mrf.mxu0
    %v1313 = vadd.f32 %v91, %v1312
    %v1314 = vpop.f32.mrf.mxu0
    %v1315 = vpop.f32.mrf.mxu0
    %v1316 = vpop.f32.mrf.mxu0
    %1317 = vdwg.mxu0
    %v1318 = vxor.u32 %v1313, 2147483648
    %v1319 = vmul.f32 %v1318, 1.442695
    %v1320 = vpow.pop %v1319
    %v1321 = vadd.f32 %v1320, 1.0
    %v1322 = vrcp.pop %v1321
    %v1323 = vmul.f32 1.0, %v1322
    %v1324 = vtanh.pop %v1313
    %v1325 = vmul.f32 %v1323, %v1184
    %1327 = vrot.lane.b32.xlu0 %v1324, 32
    %v1328 = vpop.permute.xlu0 %1327
    %v1330 = vmul.f32 %v1323, %v1328
    %1332 = vrot.lane.b32.xlu0 %v1330, 32
    %v1333 = vpop.permute.xlu0 %1332
    %v1335 = vadd.f32 %v1325, %v1333
    %v1336 = vtanh.pop %v1335
    %1338 = vrot.lane.b32.xlu0 %v1336, 32
    %v1339 = vpop.permute.xlu0 %1338
    %v1341 = vmul.f32 %v1323, %v1339
    %v1342 = vld [vmem:[#allocation6] sm:$0xff]
    %v1343 = vld [vmem:[#allocation6 + $0x8] sm:$0xff]
    %v1344 = vld [vmem:[#allocation6 + $0x10] sm:$0xff]
    %v1345 = vld [vmem:[#allocation6 + $0x18] sm:$0xff]
    %v1346 = vld [vmem:[%s6] sm:$0xff]
    %1348 = vrot.lane.b32.xlu0 %v1341, 64
    %v1349 = vpop.permute.xlu0 %1348
    %v1350 = vsel %vm93, %v1349, 0
    %1352 = vmatprep.subr.mxu0 0.0
    %1353 = vmatpush1.msra.mxu0 0.0
    %1354 = vmatprep.subr.mxu0 0.0
    %1355 = vmatpush1.msra.mxu0 0.0
    %1356 = vmatprep.subr.mxu0 0.0
    %1357 = vmatpush1.msra.mxu0 0.0
    %1358 = vmatprep.subr.mxu0 0.0
    %1359 = vmatpush1.msra.mxu0 0.0
    %1360 = vmatprep.subr.mxu0 0.0
    %1361 = vmatpush1.msra.mxu0 0.0
    %1362 = vmatprep.subr.mxu0 0.0
    %1363 = vmatpush1.msra.mxu0 0.0
    %1364 = vmatprep.subr.mxu0 0.0
    %1365 = vmatpush1.msra.mxu0 0.0
    %1366 = vmatprep.subr.mxu0 0.0
    %1367 = vmatpush1.msra.mxu0 0.0
    %1368 = vmatprep.subr.mxu0 0.0
    %1369 = vmatpush1.msra.mxu0 0.0
    %1370 = vmatprep.subr.mxu0 0.0
    %1371 = vmatpush1.msra.mxu0 0.0
    %1372 = vmatprep.subr.mxu0 0.0
    %1373 = vmatpush1.msra.mxu0 0.0
    %1374 = vmatprep.subr.mxu0 0.0
    %1375 = vmatpush1.msra.mxu0 0.0
    %1376 = vmatprep.subr.mxu0 0.0
    %1377 = vmatpush1.msra.mxu0 %v1345
    %1378 = vmatprep.subr.mxu0 0.0
    %1379 = vmatpush1.msra.mxu0 %v1344
    %1380 = vmatprep.subr.mxu0 0.0
    %1381 = vmatpush1.msra.mxu0 %v1343
    %1382 = vmatprep.subr.mxu0 0.0
    %1383 = vmatpush1.msra.mxu0 %v1342
    %1384 = vmatprep.subr.mxu0 0.0
    %1385 = vmatpush2.msra.mxu0 0.0
    %1386 = vmatprep.subr.mxu0 0.0
    %1387 = vmatpush2.msra.mxu0 0.0
    %1388 = vmatprep.subr.mxu0 0.0
    %1389 = vmatpush2.msra.mxu0 0.0
    %1390 = vmatprep.subr.mxu0 0.0
    %1391 = vmatpush2.msra.mxu0 0.0
    %1392 = vmatprep.subr.mxu0 0.0
    %1393 = vmatpush2.msra.mxu0 0.0
    %1394 = vmatprep.subr.mxu0 0.0
    %1395 = vmatpush2.msra.mxu0 0.0
    %1396 = vmatprep.subr.mxu0 0.0
    %1397 = vmatpush2.msra.mxu0 0.0
    %1398 = vmatprep.subr.mxu0 0.0
    %1399 = vmatpush2.msra.mxu0 0.0
    %1400 = vmatprep.subr.mxu0 0.0
    %1401 = vmatpush2.msra.mxu0 0.0
    %1402 = vmatprep.subr.mxu0 0.0
    %1403 = vmatpush2.msra.mxu0 0.0
    %1404 = vmatprep.subr.mxu0 0.0
    %1405 = vmatpush2.msra.mxu0 0.0
    %1406 = vmatprep.subr.mxu0 0.0
    %1407 = vmatpush2.msra.mxu0 0.0
    %1408 = vmatprep.subr.mxu0 0.0
    %1409 = vmatpush2.msra.mxu0 0.0
    %1410 = vmatprep.subr.mxu0 0.0
    %1411 = vmatpush2.msra.mxu0 0.0
    %1412 = vmatprep.subr.mxu0 0.0
    %1413 = vmatpush2.msra.mxu0 0.0
    %1414 = vmatprep.subr.mxu0 0.0
    %1415 = vmatpush2.msra.mxu0 0.0
    %1416 = vmatprep.mubr.f32.mxu0 0.0
    %1417 = vmatmul.mubr.f32.gmra.mxu0 %v1350
    %v1418 = vpop.f32.mrf.mxu0
    %v1419 = vadd.f32 %v1346, %v1418
    %v1420 = vpop.f32.mrf.mxu0
    %1421 = vdwg.mxu0
    %v1422 = vmax.f32 %v1419, 0.0
    %v1423 = vld [vmem:[%s7] sm:$0xff]
    %v1424 = vld [vmem:[%s7 + $0x8] sm:$0xff]
    %v1425 = vld [vmem:[%s7 + $0x10] sm:$0xff]
    %v1426 = vld [vmem:[%s7 + $0x18] sm:$0xff]
    %v1427 = vld [vmem:[%s7 + $0x20] sm:$0xff]
    %v1428 = vld [vmem:[%s7 + $0x28] sm:$0xff]
    %v1429 = vld [vmem:[%s7 + $0x30] sm:$0xff]
    %v1430 = vld [vmem:[%s7 + $0x38] sm:$0xff]
    %v1431 = vld [vmem:[%s8] sm:$0xff]
    %v1433 = vsel %vm120, %v1422, 0
    %1435 = vmatprep.subr.mxu0 0.0
    %1436 = vmatpush1.msra.mxu0 0.0
    %1437 = vmatprep.subr.mxu0 0.0
    %1438 = vmatpush1.msra.mxu0 0.0
    %1439 = vmatprep.subr.mxu0 0.0
    %1440 = vmatpush1.msra.mxu0 0.0
    %1441 = vmatprep.subr.mxu0 0.0
    %1442 = vmatpush1.msra.mxu0 0.0
    %1443 = vmatprep.subr.mxu0 0.0
    %1444 = vmatpush1.msra.mxu0 0.0
    %1445 = vmatprep.subr.mxu0 0.0
    %1446 = vmatpush1.msra.mxu0 0.0
    %1447 = vmatprep.subr.mxu0 0.0
    %1448 = vmatpush1.msra.mxu0 0.0
    %1449 = vmatprep.subr.mxu0 0.0
    %1450 = vmatpush1.msra.mxu0 0.0
    %1451 = vmatprep.subr.mxu0 0.0
    %1452 = vmatpush1.msra.mxu0 %v1430
    %1453 = vmatprep.subr.mxu0 0.0
    %1454 = vmatpush1.msra.mxu0 %v1429
    %1455 = vmatprep.subr.mxu0 0.0
    %1456 = vmatpush1.msra.mxu0 %v1428
    %1457 = vmatprep.subr.mxu0 0.0
    %1458 = vmatpush1.msra.mxu0 %v1427
    %1459 = vmatprep.subr.mxu0 0.0
    %1460 = vmatpush1.msra.mxu0 %v1426
    %1461 = vmatprep.subr.mxu0 0.0
    %1462 = vmatpush1.msra.mxu0 %v1425
    %1463 = vmatprep.subr.mxu0 0.0
    %1464 = vmatpush1.msra.mxu0 %v1424
    %1465 = vmatprep.subr.mxu0 0.0
    %1466 = vmatpush1.msra.mxu0 %v1423
    %1467 = vmatprep.subr.mxu0 0.0
    %1468 = vmatpush2.msra.mxu0 0.0
    %1469 = vmatprep.subr.mxu0 0.0
    %1470 = vmatpush2.msra.mxu0 0.0
    %1471 = vmatprep.subr.mxu0 0.0
    %1472 = vmatpush2.msra.mxu0 0.0
    %1473 = vmatprep.subr.mxu0 0.0
    %1474 = vmatpush2.msra.mxu0 0.0
    %1475 = vmatprep.subr.mxu0 0.0
    %1476 = vmatpush2.msra.mxu0 0.0
    %1477 = vmatprep.subr.mxu0 0.0
    %1478 = vmatpush2.msra.mxu0 0.0
    %1479 = vmatprep.subr.mxu0 0.0
    %1480 = vmatpush2.msra.mxu0 0.0
    %1481 = vmatprep.subr.mxu0 0.0
    %1482 = vmatpush2.msra.mxu0 0.0
    %1483 = vmatprep.subr.mxu0 0.0
    %1484 = vmatpush2.msra.mxu0 0.0
    %1485 = vmatprep.subr.mxu0 0.0
    %1486 = vmatpush2.msra.mxu0 0.0
    %1487 = vmatprep.subr.mxu0 0.0
    %1488 = vmatpush2.msra.mxu0 0.0
    %1489 = vmatprep.subr.mxu0 0.0
    %1490 = vmatpush2.msra.mxu0 0.0
    %1491 = vmatprep.subr.mxu0 0.0
    %1492 = vmatpush2.msra.mxu0 0.0
    %1493 = vmatprep.subr.mxu0 0.0
    %1494 = vmatpush2.msra.mxu0 0.0
    %1495 = vmatprep.subr.mxu0 0.0
    %1496 = vmatpush2.msra.mxu0 0.0
    %1497 = vmatprep.subr.mxu0 0.0
    %1498 = vmatpush2.msra.mxu0 0.0
    %1499 = vmatprep.mubr.f32.mxu0 0.0
    %1500 = vmatmul.mubr.f32.gmra.mxu0 %v1433
    %v1501 = vpop.f32.mrf.mxu0
    %v1502 = vadd.f32 %v1431, %v1501
    %v1503 = vpop.f32.mrf.mxu0
    %1504 = vdwg.mxu0
    %vm1505 = vcmask 31744
    %1506 = vst.msk [vmem:[%s9] sm:$0xff] %vm1505, %v1502
    // Predicated region
    $region50: #{tpu_custom_call.1} parent=1 // pred_check
      _
    $region51: #{tpu_custom_call.1} parent=1 // pred_check_branch
      %1508 = sbr.rel (0) target = $region53
    $region52: #{tpu_custom_call.1} parent=1 // pred_region
      _
    $region53: #{tpu_custom_call.1} parent=1 // pred_fallthru
      _
    // Predicated region
    $region54: #{tpu_custom_call.1} parent=1 // pred_check
      _
    $region55: #{tpu_custom_call.1} parent=1 // pred_check_branch
      %1510 = sbr.rel (0) target = $region57
    $region56: #{tpu_custom_call.1} parent=1 // pred_region
      _
    $region57: #{tpu_custom_call.1} parent=1 // pred_fallthru
      _
    %1511 = vsyncpa [#allocation3], 1
    %1512 = vsyncpa [#allocation5], 1

</llo_original>
